<compile_context>
chip_gen: v7x
topology: tpu7x:2x2x1
jax: 0.10.0
libtpu: 0.0.40
codegen_flags: <defaults>
</compile_context>

<pallas_src>
import math
import functools

import jax
import jax.numpy as jnp
import numpy as np
from jax.experimental import pallas as pl
from jax.experimental.pallas import tpu as pltpu


def _round_up(x, m):
    return ((x + m - 1) // m) * m


def _vmem_capacity_bytes():
    """Physical VMEM of the local TPU generation (conservative fallback)."""
    try:
        return int(pltpu.get_tpu_info().vmem_capacity_bytes)
    except Exception:
        return 64 * 1024 * 1024   # assume the smallest (v7x) if the query fails


@functools.partial(jax.jit, static_argnames=("kernel_size", "stride", "dilation", "eps"))
def temporal_conv_forward(x, w, b, gamma, beta, *, kernel_size, stride=1,
                          dilation=1, eps=1e-5):
    """Forward pass of TemporalConv (training-mode BatchNorm).

    x:     (N, Cin, T, V)  float32
    w:     (Cout, Cin, K)  conv weight (the W-dim of the (K,1) kernel is size 1)
    b:     (Cout,)         conv bias -- unused: cancels exactly under training-mode BN
    gamma: (Cout,)         BN weight
    beta:  (Cout,)         BN bias
    """
    # TODO(synk): if ever reused with eval-mode/running statistics the conv bias
    #             must be re-added (it only cancels with batch statistics).
    del b
    N, Cin, T, V = x.shape
    Cout = w.shape[0]
    K = kernel_size
    if stride != 1:
        # TODO(synk): stride > 1 needs strided tap gathers in the flattened time*V
        #             layout; not implemented here.
        raise NotImplementedError("stride > 1 is not supported by this Pallas kernel")

    pad = (K + (K - 1) * (dilation - 1) - 1) // 2
    T_out = T + 2 * pad - dilation * (K - 1)

    # ---- generation-aware tiling / VMEM budget --------------------------------
    vmem_cap = _vmem_capacity_bytes()
    if vmem_cap >= 96 * 1024 * 1024:            # v5e / v6e: 128 MiB physical VMEM
        max_tile_rows = 2048
        vmem_limit = 64 * 1024 * 1024
    else:                                       # v7x: 64 MiB physical VMEM
        max_tile_rows = 1024
        vmem_limit = 40 * 1024 * 1024

    Vp = _round_up(V, 8)                               # sublane-aligned node axis
    tile_t = max(1, min(max_tile_rows // Vp, T_out))   # output time steps per tile
    T_out_pad = _round_up(T_out, tile_t)
    nT = T_out_pad // tile_t
    tile_tv = tile_t * Vp                              # output rows per tile (mult of 8)
    Tp_pad = T_out_pad + dilation * (K - 1)            # padded input time extent
    TVp = Tp_pad * Vp
    TVo_pad = T_out_pad * Vp

    # ---- layout glue: channels-last, flattened (time, node), bf16 MXU inputs ---
    x_pad = jnp.pad(
        x, ((0, 0), (0, 0),
            (pad, pad + (T_out_pad - T_out)),          # conv pad + tile-tail pad
            (0, Vp - V)))                              # sublane pad of node axis
    x_cl = jnp.transpose(x_pad, (0, 2, 3, 1)).reshape(N, TVp, Cin).astype(jnp.bfloat16)
    # im2col weight slab: row index k*Cin + ci  <->  w[co, ci, k]
    w_cl = jnp.transpose(w, (2, 1, 0)).reshape(K * Cin, Cout).astype(jnp.bfloat16)

    # Static per-row validity mask over padded output rows (t < T_out and v < V);
    # excludes tail/node padding from the BN statistics.
    r = np.arange(TVo_pad)
    mask_np = ((r // Vp < T_out) & (r % Vp < V)).astype(np.float32).reshape(TVo_pad, 1)
    mask_rows = jnp.asarray(mask_np)

    use_concat = Cin < 128   # below MXU-native contraction: one deep dot is better

    def conv_tile(x_ref, w_ref, j):
        """(tile_tv, Cout) f32 conv result for output-row tile j of this sample."""
        p0 = pl.multiple_of(j * tile_tv, tile_tv)
        if K == 1:
            return jnp.dot(x_ref[0, pl.ds(p0, tile_tv), :], w_ref[...],
                           preferred_element_type=jnp.float32)
        if use_concat:
            # Small Cin: fold K taps into one (tile, K*Cin) slab -> single MXU dot.
            taps = [x_ref[0, pl.ds(p0 + k * dilation * Vp, tile_tv), :]
                    for k in range(K)]
            xcol = jnp.concatenate(taps, axis=1)
            return jnp.dot(xcol, w_ref[...], preferred_element_type=jnp.float32)
        # Cin already fills the MXU contraction: K accumulating dots, zero copies.
        acc = jnp.dot(x_ref[0, pl.ds(p0, tile_tv), :],
                      w_ref[pl.ds(0, Cin), :], preferred_element_type=jnp.float32)
        for k in range(1, K):
            acc = acc + jnp.dot(
                x_ref[0, pl.ds(p0 + k * dilation * Vp, tile_tv), :],
                w_ref[pl.ds(k * Cin, Cin), :], preferred_element_type=jnp.float32)
        return acc

    cparams = pltpu.CompilerParams(
        # Both grid axes are independent (per-tile partial stats); on v7x megacore
        # either axis may be sharded across the two TensorCores.
        dimension_semantics=("parallel", "parallel"),
        vmem_limit_bytes=vmem_limit,
    )

    # ---- pass 1: conv per tile + centered per-tile BN partial statistics -------
    def stats_kernel(x_ref, w_ref, m_ref, s_ref):
        j = pl.program_id(1)
        y = conv_tile(x_ref, w_ref, j)                       # (tile_tv, Cout) f32
        mask = m_ref[...]                                    # (tile_tv, 1) f32
        n_real = jnp.sum(mask, axis=0, keepdims=True)        # (1, 1), > 0 by constr.
        s1 = jnp.sum(y * mask, axis=0, keepdims=True)        # (1, Cout)
        mu = s1 / n_real
        d = (y - mu) * mask
        m2 = jnp.sum(d * d, axis=0, keepdims=True)           # (1, Cout)
        s_ref[0, 0, :, :] = jnp.concatenate([s1, m2], axis=0)

    stats = pl.pallas_call(
        stats_kernel,
        grid=(N, nT),
        in_specs=[
            # full (padded) sample resident across the inner time-tile axis
            # TODO(synk): per-tile halo windows (pl.Element) for long T / wide Cin.
            pl.BlockSpec((1, TVp, Cin), lambda n, j: (n, 0, 0)),
            pl.BlockSpec((K * Cin, Cout), lambda n, j: (0, 0)),
            pl.BlockSpec((tile_tv, 1), lambda n, j: (j, 0)),
        ],
        out_specs=pl.BlockSpec((1, 1, 2, Cout), lambda n, j: (n, j, 0, 0)),
        out_shape=jax.ShapeDtypeStruct((N, nT, 2, Cout), jnp.float32),
        compiler_params=cparams,
    )(x_cl, w_cl, mask_rows)

    # ---- glue: combine per-tile partials (Chan) into batch mean / biased var ---
    t_lo = np.arange(nT) * tile_t
    cnt_np = ((np.minimum(t_lo + tile_t, T_out) - t_lo) * V).astype(np.float32)
    cnt_j = jnp.asarray(cnt_np).reshape(1, nT, 1)            # per-tile real row count
    total = float(N * T_out * V)

    s1 = stats[:, :, 0, :]                                   # (N, nT, Cout)
    m2 = stats[:, :, 1, :]
    mean = jnp.sum(s1, axis=(0, 1)) / total                  # (Cout,)
    mu_j = s1 / cnt_j
    var = (jnp.sum(m2, axis=(0, 1)) +
           jnp.sum(cnt_j * jnp.square(mu_j - mean[None, None, :]), axis=(0, 1))) / total
    var = jnp.maximum(var, 0.0)                              # biased variance

    scale = gamma / jnp.sqrt(var + eps)
    shift = beta - mean * scale
    scale2 = scale.astype(jnp.float32).reshape(1, Cout)
    shift2 = shift.astype(jnp.float32).reshape(1, Cout)

    # ---- pass 2: fused conv recompute + BN affine; only final output hits HBM --
    def fused_kernel(x_ref, w_ref, sc_ref, sh_ref, o_ref):
        j = pl.program_id(1)
        y = conv_tile(x_ref, w_ref, j)                       # (tile_tv, Cout) f32
        # TODO(synk): lane-dense (V folded into lanes) store path for Cout < 128.
        o_ref[0] = y * sc_ref[...] + sh_ref[...]

    out_cl = pl.pallas_call(
        fused_kernel,
        grid=(N, nT),
        in_specs=[
            pl.BlockSpec((1, TVp, Cin), lambda n, j: (n, 0, 0)),
            pl.BlockSpec((K * Cin, Cout), lambda n, j: (0, 0)),
            pl.BlockSpec((1, Cout), lambda n, j: (0, 0)),
            pl.BlockSpec((1, Cout), lambda n, j: (0, 0)),
        ],
        out_specs=pl.BlockSpec((1, tile_tv, Cout), lambda n, j: (n, j, 0)),
        out_shape=jax.ShapeDtypeStruct((N, TVo_pad, Cout), jnp.float32),
        compiler_params=cparams,
    )(x_cl, w_cl, scale2, shift2)

    # back to the PyTorch NCHW convention (drop the t/v tile padding)
    out = out_cl.reshape(N, T_out_pad, Vp, Cout)[:, :T_out, :V, :]
    return jnp.transpose(out, (0, 3, 1, 2))


def reference_forward(x, w, b, gamma, beta, *, kernel_size, stride=1,
                      dilation=1, eps=1e-5):
    """Plain-JAX reference. Conv uses bf16 inputs + f32 accumulation to match the
    Pallas kernel's MXU compute dtype."""
    K = kernel_size
    pad = (K + (K - 1) * (dilation - 1) - 1) // 2
    w4 = w[:, :, :, None]                                    # (Cout, Cin, K, 1) OIHW
    y = jax.lax.conv_general_dilated(
        x.astype(jnp.bfloat16), w4.astype(jnp.bfloat16),
        window_strides=(stride, 1),
        padding=((pad, pad), (0, 0)),
        rhs_dilation=(dilation, 1),
        dimension_numbers=("NCHW", "OIHW", "NCHW"),
        preferred_element_type=jnp.float32)
    y = y + b[None, :, None, None]
    mean = jnp.mean(y, axis=(0, 2, 3), keepdims=True)
    var = jnp.mean((y - mean) ** 2, axis=(0, 2, 3), keepdims=True)
    yh = (y - mean) / jnp.sqrt(var + eps)
    return yh * gamma[None, :, None, None] + beta[None, :, None, None]


def _run_case(key, N, Cin, Cout, T, V, K, dilation):
    kx, kw, kb, kg, kbt = jax.random.split(key, 5)
    x = jax.random.normal(kx, (N, Cin, T, V), jnp.float32)
    fan_in = Cin * K
    bound = 1.0 / math.sqrt(fan_in)
    w = jax.random.uniform(kw, (Cout, Cin, K), jnp.float32, -bound, bound)
    b = jax.random.uniform(kb, (Cout,), jnp.float32, -bound, bound)
    gamma = 1.0 + 0.1 * jax.random.normal(kg, (Cout,), jnp.float32)
    beta = 0.1 * jax.random.normal(kbt, (Cout,), jnp.float32)

    out = temporal_conv_forward(x, w, b, gamma, beta,
                                kernel_size=K, stride=1, dilation=dilation)
    out = jax.block_until_ready(out)
    ref = reference_forward(x, w, b, gamma, beta,
                            kernel_size=K, stride=1, dilation=dilation)
    np.testing.assert_allclose(np.asarray(out), np.asarray(ref),
                               rtol=1e-3, atol=1e-3)


if __name__ == "__main__":
    key = jax.random.PRNGKey(0)
    k1, k2 = jax.random.split(key)
    # small canonical case (V already a multiple of 8)
    _run_case(k1, N=2, Cin=4, Cout=8, T=16, V=8, K=3, dilation=1)
    # case exercising node-axis padding (V=6 -> Vp=8), masked stats and dilation
    _run_case(k2, N=2, Cin=4, Cout=8, T=10, V=6, K=3, dilation=2)
    print("KERNEL_OK")
</pallas_src>

<mosaic_0001>
module attributes {stable_mosaic.version = 11 : i64} {
  func.func @stats_kernel(%arg0: i32, %arg1: i32, %arg2: memref<1x144x4xbf16, #tpu.memory_space<vmem>>, %arg3: memref<12x8xbf16, #tpu.memory_space<vmem>>, %arg4: memref<128x1xf32, #tpu.memory_space<vmem>>, %arg5: memref<1x1x2x8xf32, #tpu.memory_space<vmem>>) attributes {dimension_semantics = [#tpu.dimension_semantics<parallel>, #tpu.dimension_semantics<parallel>], iteration_bounds = array<i64: 2, 1>, scalar_prefetch = 0 : i64, scratch_operands = 0 : i64, tpu.core_type = #tpu.core_type<tc>, window_params = [{transform_indices = @transform_0, window_bounds = array<i64: 1, 144, 4>}, {pipeline_mode = #tpu.pipeline_mode<synchronous>, transform_indices = @transform_1, window_bounds = array<i64: 12, 8>}, {transform_indices = @transform_2, window_bounds = array<i64: 128, 1>}, {transform_indices = @transform_3, window_bounds = array<i64: 1, 1, 2, 8>}]} {
    %c128_i32 = arith.constant 128 : i32
    %0 = arith.muli %arg1, %c128_i32 : i32
    %1 = tpu.assume_multiple %0, 128 : i32
    %c0_i32 = arith.constant 0 : i32
    %2 = arith.addi %1, %c0_i32 : i32
    %c0 = arith.constant 0 : index
    %3 = arith.index_cast %2 : i32 to index
    %c0_0 = arith.constant 0 : index
    %4 = vector.load %arg2[%c0, %3, %c0_0] : memref<1x144x4xbf16, #tpu.memory_space<vmem>>, vector<1x128x4xbf16>
    %5 = vector.shape_cast %4 : vector<1x128x4xbf16> to vector<128x4xbf16>
    %c8_i32 = arith.constant 8 : i32
    %6 = arith.addi %1, %c8_i32 : i32
    %c0_1 = arith.constant 0 : index
    %7 = arith.index_cast %6 : i32 to index
    %c0_2 = arith.constant 0 : index
    %8 = vector.load %arg2[%c0_1, %7, %c0_2] : memref<1x144x4xbf16, #tpu.memory_space<vmem>>, vector<1x128x4xbf16>
    %9 = vector.shape_cast %8 : vector<1x128x4xbf16> to vector<128x4xbf16>
    %c16_i32 = arith.constant 16 : i32
    %10 = arith.addi %1, %c16_i32 : i32
    %c0_3 = arith.constant 0 : index
    %11 = arith.index_cast %10 : i32 to index
    %c0_4 = arith.constant 0 : index
    %12 = vector.load %arg2[%c0_3, %11, %c0_4] : memref<1x144x4xbf16, #tpu.memory_space<vmem>>, vector<1x128x4xbf16>
    %13 = vector.shape_cast %12 : vector<1x128x4xbf16> to vector<128x4xbf16>
    %14 = tpu.concatenate %5, %9, %13 in 1 : vector<128x4xbf16>, vector<128x4xbf16>, vector<128x4xbf16> -> vector<128x12xbf16>
    %c0_5 = arith.constant 0 : index
    %c0_6 = arith.constant 0 : index
    %15 = vector.load %arg3[%c0_5, %c0_6] : memref<12x8xbf16, #tpu.memory_space<vmem>>, vector<12x8xbf16>
    %cst = arith.constant dense<0.000000e+00> : vector<128x8xf32>
    %16 = tpu.matmul %14, %15, %cst {dimension_numbers = #tpu.dot_dimension_numbers<[1], [0], [0], [1], [0, 0, 1, 1], [], []>} : vector<128x12xbf16>, vector<12x8xbf16>, vector<128x8xf32> -> vector<128x8xf32>
    %c0_7 = arith.constant 0 : index
    %c0_8 = arith.constant 0 : index
    %17 = vector.load %arg4[%c0_7, %c0_8] : memref<128x1xf32, #tpu.memory_space<vmem>>, vector<128x1xf32>
    %cst_9 = arith.constant dense<0.000000e+00> : vector<1xf32>
    %18 = vector.multi_reduction <add>, %17, %cst_9 [0] : vector<128x1xf32> to vector<1xf32>
    %19 = vector.shape_cast %18 : vector<1xf32> to vector<1x1xf32>
    %20 = vector.broadcast %17 : vector<128x1xf32> to vector<128x8xf32>
    %21 = arith.mulf %16, %20 : vector<128x8xf32>
    %cst_10 = arith.constant dense<0.000000e+00> : vector<8xf32>
    %22 = vector.multi_reduction <add>, %21, %cst_10 [0] : vector<128x8xf32> to vector<8xf32>
    %23 = vector.shape_cast %22 : vector<8xf32> to vector<1x8xf32>
    %24 = vector.broadcast %19 : vector<1x1xf32> to vector<1x8xf32>
    %25 = arith.divf %23, %24 : vector<1x8xf32>
    %26 = vector.broadcast %25 : vector<1x8xf32> to vector<128x8xf32>
    %27 = arith.subf %16, %26 : vector<128x8xf32>
    %28 = vector.broadcast %17 : vector<128x1xf32> to vector<128x8xf32>
    %29 = arith.mulf %27, %28 : vector<128x8xf32>
    %30 = arith.mulf %29, %29 : vector<128x8xf32>
    %cst_11 = arith.constant dense<0.000000e+00> : vector<8xf32>
    %31 = vector.multi_reduction <add>, %30, %cst_11 [0] : vector<128x8xf32> to vector<8xf32>
    %32 = vector.shape_cast %31 : vector<8xf32> to vector<1x8xf32>
    %33 = tpu.concatenate %23, %32 in 0 : vector<1x8xf32>, vector<1x8xf32> -> vector<2x8xf32>
    %c0_12 = arith.constant 0 : index
    %c0_13 = arith.constant 0 : index
    %c0_14 = arith.constant 0 : index
    %c0_15 = arith.constant 0 : index
    %34 = vector.load %arg5[%c0_12, %c0_13, %c0_14, %c0_15] : memref<1x1x2x8xf32, #tpu.memory_space<vmem>>, vector<1x1x2x8xf32>
    %35 = vector.shape_cast %34 : vector<1x1x2x8xf32> to vector<2x8xf32>
    %36 = vector.shape_cast %33 : vector<2x8xf32> to vector<1x1x2x8xf32>
    tpu.vector_store %arg5[%c0_12, %c0_13, %c0_14, %c0_15], %36 {strides = array<i32>} : memref<1x1x2x8xf32, #tpu.memory_space<vmem>>, vector<1x1x2x8xf32>,
    return
  }
  func.func @transform_0(%arg0: i32, %arg1: i32) -> (i32, i32, i32) {
    %c0_i32 = arith.constant 0 : i32
    %c0_i32_0 = arith.constant 0 : i32
    %c0_i32_1 = arith.constant 0 : i32
    return %arg0, %c0_i32, %c0_i32_0 : i32, i32, i32
  }
  func.func @transform_1(%arg0: i32, %arg1: i32) -> (i32, i32) {
    %c0_i32 = arith.constant 0 : i32
    %c0_i32_0 = arith.constant 0 : i32
    %c0_i32_1 = arith.constant 0 : i32
    return %c0_i32, %c0_i32_0 : i32, i32
  }
  func.func @transform_2(%arg0: i32, %arg1: i32) -> (i32, i32) {
    %c0_i32 = arith.constant 0 : i32
    %c0_i32_0 = arith.constant 0 : i32
    return %arg1, %c0_i32 : i32, i32
  }
  func.func @transform_3(%arg0: i32, %arg1: i32) -> (i32, i32, i32, i32) {
    %c0_i32 = arith.constant 0 : i32
    %c0_i32_0 = arith.constant 0 : i32
    %c0_i32_1 = arith.constant 0 : i32
    return %arg0, %arg1, %c0_i32, %c0_i32_0 : i32, i32, i32, i32
  }
}

module attributes {stable_mosaic.version = 11 : i64} {
  func.func @fused_kernel(%arg0: i32, %arg1: i32, %arg2: memref<1x144x4xbf16, #tpu.memory_space<vmem>>, %arg3: memref<12x8xbf16, #tpu.memory_space<vmem>>, %arg4: memref<1x8xf32, #tpu.memory_space<vmem>>, %arg5: memref<1x8xf32, #tpu.memory_space<vmem>>, %arg6: memref<1x128x8xf32, #tpu.memory_space<vmem>>) attributes {dimension_semantics = [#tpu.dimension_semantics<parallel>, #tpu.dimension_semantics<parallel>], iteration_bounds = array<i64: 2, 1>, scalar_prefetch = 0 : i64, scratch_operands = 0 : i64, tpu.core_type = #tpu.core_type<tc>, window_params = [{transform_indices = @transform_0, window_bounds = array<i64: 1, 144, 4>}, {pipeline_mode = #tpu.pipeline_mode<synchronous>, transform_indices = @transform_1, window_bounds = array<i64: 12, 8>}, {pipeline_mode = #tpu.pipeline_mode<synchronous>, transform_indices = @transform_2, window_bounds = array<i64: 1, 8>}, {pipeline_mode = #tpu.pipeline_mode<synchronous>, transform_indices = @transform_3, window_bounds = array<i64: 1, 8>}, {transform_indices = @transform_4, window_bounds = array<i64: 1, 128, 8>}]} {
    %c128_i32 = arith.constant 128 : i32
    %0 = arith.muli %arg1, %c128_i32 : i32
    %1 = tpu.assume_multiple %0, 128 : i32
    %c0_i32 = arith.constant 0 : i32
    %2 = arith.addi %1, %c0_i32 : i32
    %c0 = arith.constant 0 : index
    %3 = arith.index_cast %2 : i32 to index
    %c0_0 = arith.constant 0 : index
    %4 = vector.load %arg2[%c0, %3, %c0_0] : memref<1x144x4xbf16, #tpu.memory_space<vmem>>, vector<1x128x4xbf16>
    %5 = vector.shape_cast %4 : vector<1x128x4xbf16> to vector<128x4xbf16>
    %c8_i32 = arith.constant 8 : i32
    %6 = arith.addi %1, %c8_i32 : i32
    %c0_1 = arith.constant 0 : index
    %7 = arith.index_cast %6 : i32 to index
    %c0_2 = arith.constant 0 : index
    %8 = vector.load %arg2[%c0_1, %7, %c0_2] : memref<1x144x4xbf16, #tpu.memory_space<vmem>>, vector<1x128x4xbf16>
    %9 = vector.shape_cast %8 : vector<1x128x4xbf16> to vector<128x4xbf16>
    %c16_i32 = arith.constant 16 : i32
    %10 = arith.addi %1, %c16_i32 : i32
    %c0_3 = arith.constant 0 : index
    %11 = arith.index_cast %10 : i32 to index
    %c0_4 = arith.constant 0 : index
    %12 = vector.load %arg2[%c0_3, %11, %c0_4] : memref<1x144x4xbf16, #tpu.memory_space<vmem>>, vector<1x128x4xbf16>
    %13 = vector.shape_cast %12 : vector<1x128x4xbf16> to vector<128x4xbf16>
    %14 = tpu.concatenate %5, %9, %13 in 1 : vector<128x4xbf16>, vector<128x4xbf16>, vector<128x4xbf16> -> vector<128x12xbf16>
    %c0_5 = arith.constant 0 : index
    %c0_6 = arith.constant 0 : index
    %15 = vector.load %arg3[%c0_5, %c0_6] : memref<12x8xbf16, #tpu.memory_space<vmem>>, vector<12x8xbf16>
    %cst = arith.constant dense<0.000000e+00> : vector<128x8xf32>
    %16 = tpu.matmul %14, %15, %cst {dimension_numbers = #tpu.dot_dimension_numbers<[1], [0], [0], [1], [0, 0, 1, 1], [], []>} : vector<128x12xbf16>, vector<12x8xbf16>, vector<128x8xf32> -> vector<128x8xf32>
    %c0_7 = arith.constant 0 : index
    %c0_8 = arith.constant 0 : index
    %17 = vector.load %arg4[%c0_7, %c0_8] : memref<1x8xf32, #tpu.memory_space<vmem>>, vector<1x8xf32>
    %18 = vector.broadcast %17 : vector<1x8xf32> to vector<128x8xf32>
    %19 = arith.mulf %16, %18 : vector<128x8xf32>
    %c0_9 = arith.constant 0 : index
    %c0_10 = arith.constant 0 : index
    %20 = vector.load %arg5[%c0_9, %c0_10] : memref<1x8xf32, #tpu.memory_space<vmem>>, vector<1x8xf32>
    %21 = vector.broadcast %20 : vector<1x8xf32> to vector<128x8xf32>
    %22 = arith.addf %19, %21 : vector<128x8xf32>
    %c0_11 = arith.constant 0 : index
    %c0_12 = arith.constant 0 : index
    %c0_13 = arith.constant 0 : index
    %23 = vector.load %arg6[%c0_11, %c0_12, %c0_13] : memref<1x128x8xf32, #tpu.memory_space<vmem>>, vector<1x128x8xf32>
    %24 = vector.shape_cast %23 : vector<1x128x8xf32> to vector<128x8xf32>
    %25 = vector.shape_cast %22 : vector<128x8xf32> to vector<1x128x8xf32>
    tpu.vector_store %arg6[%c0_11, %c0_12, %c0_13], %25 {strides = array<i32>} : memref<1x128x8xf32, #tpu.memory_space<vmem>>, vector<1x128x8xf32>,
    return
  }
  func.func @transform_0(%arg0: i32, %arg1: i32) -> (i32, i32, i32) {
    %c0_i32 = arith.constant 0 : i32
    %c0_i32_0 = arith.constant 0 : i32
    %c0_i32_1 = arith.constant 0 : i32
    return %arg0, %c0_i32, %c0_i32_0 : i32, i32, i32
  }
  func.func @transform_1(%arg0: i32, %arg1: i32) -> (i32, i32) {
    %c0_i32 = arith.constant 0 : i32
    %c0_i32_0 = arith.constant 0 : i32
    %c0_i32_1 = arith.constant 0 : i32
    return %c0_i32, %c0_i32_0 : i32, i32
  }
  func.func @transform_2(%arg0: i32, %arg1: i32) -> (i32, i32) {
    %c0_i32 = arith.constant 0 : i32
    %c0_i32_0 = arith.constant 0 : i32
    %c0_i32_1 = arith.constant 0 : i32
    return %c0_i32, %c0_i32_0 : i32, i32
  }
  func.func @transform_3(%arg0: i32, %arg1: i32) -> (i32, i32) {
    %c0_i32 = arith.constant 0 : i32
    %c0_i32_0 = arith.constant 0 : i32
    %c0_i32_1 = arith.constant 0 : i32
    return %c0_i32, %c0_i32_0 : i32, i32
  }
  func.func @transform_4(%arg0: i32, %arg1: i32) -> (i32, i32, i32) {
    %c0_i32 = arith.constant 0 : i32
    %c0_i32_0 = arith.constant 0 : i32
    return %arg0, %arg1, %c0_i32 : i32, i32, i32
  }
}

</mosaic_0001>

<llo_original>
// kernel: temporal_conv_forward.3
$region0: #{temporal_conv_forward.3}
  #allocation0 [shape = 'u32[]', space=smem, size = 0x4, offset = 0x4, fixed_abs, tag = 'smem constant byte address 0x4 - core index']
  #allocation1 [shape = 'u32[144,128]{1,0:T(1,128)}', space=vmem, size = 0x12000, scoped, tag = 'internal scratch']
  %s0 = inlined_call_operand.vmem [shape: bf16[2,144,4], index: 0, kind: input, shape index: {}]
  %s1 = inlined_call_operand.vmem [shape: bf16[12,8], index: 1, kind: input, shape index: {}]
  %s2 = inlined_call_operand.vmem [shape: f32[1,8], index: 2, kind: input, shape index: {}]
  %s3 = inlined_call_operand.vmem [shape: f32[1,8], index: 3, kind: input, shape index: {}]
  %s4 = inlined_call_operand.vmem [shape: f32[2,128,8], index: 4, kind: output, shape index: {}]
  %s5 = sld [smem:[#allocation0]]
  $region49: #{temporal_conv_forward.3} parent=0
    _
  %s7 = ssub.s32 1, %s5
  %s8 = scalar_select 0, %s7, %s5
  loop: start=0, step=1, limit=4
  $region2: #{temporal_conv_forward.3} parent=0 // loop_pre_header
    _
  $region3: #{temporal_conv_forward.3} parent=0 // loop_header
    %s10 = sphi 0, %s14
    %p11 = scmp.ge.s32.totalorder %s10, 4
    %s17 = sphi 0, %s29
    %s18 = sphi 0, %s25
    %s19 = sphi 0, %s17
    %s20 = sphi 0, %s18
    %s21 = sphi 0, %s19
    %s22 = sphi 0, %s20
    %s32 = sphi 0, %s34
    %s35 = sphi 0, %s32
    %s36 = sphi 0, %s35
    %s52 = sphi 0, %s36
    %s56 = sphi 0, %s56
    %s58 = sphi 0, %s56
    %s59 = sphi 0, %s58
    %s73 = sphi 0, %s59
    %s77 = sphi 0, %s77
    %s79 = sphi 0, %s77
    %s80 = sphi 0, %s79
    %s94 = sphi 0, %s80
    %s98 = sphi 0, %s98
    %s100 = sphi 0, %s98
    %s101 = sphi 0, %s100
    %s115 = sphi 0, %s101
    %s123 = sphi 0, %s125
    %s126 = sphi 0, %s123
    %s127 = sphi 0, %s126
    %s143 = sphi 0, %s127
  $region4: #{temporal_conv_forward.3} parent=0 // loop_header_branch
    %13 = sbr.rel (%p11) target = $region8
  $region5: #{temporal_conv_forward.3} parent=0 // loop_body
    %s15 = ssub.s32 %s10, 1
    %s16 = ssub.s32 %s10, 2
    %s23 = sadd.s32 1, %s18
    %p24 = scmp.ge.s32.totalorder %s23, 1
    %s25 = scalar_select %p24, 0, %s23
    %s26 = sadd.s32 1, %s17
    %s27 = scalar_select %p24, %s26, %s17
    %p28 = scmp.ge.s32.totalorder %s27, 2
    %s29 = scalar_select %p28, 0, %s27
    %s30 = ssub.s32 %s17, %s29
    %p31 = scmp.eq.s32.totalorder %s30, 0
    %s33 = sadd.s32 %s32, 1
    %s34 = scalar_select %p31, %s32, %s33
    %p37 = pneg %p31
    %p38 = scmp.eq.s32.totalorder %s10, 1
    %p39 = por %p37, %p38
    %p40 = scmp.ne.s32.totalorder %s32, %s35
    %p41 = scmp.eq.s32.totalorder %s10, 0
    %p42 = por %p40, %p41
    %p43 = scmp.ne.s32.totalorder %s32, %s35
    %p44 = scmp.eq.s32.totalorder %s15, 1
    %p45 = por %p43, %p44
    %p46 = scmp.ne.s32.totalorder %s35, %s36
    %p47 = scmp.eq.s32.totalorder %s15, 0
    %p48 = por %p46, %p47
    %p49 = scmp.ne.s32.totalorder %s35, %s36
    %p50 = scmp.eq.s32.totalorder %s16, 1
    %p51 = por %p49, %p50
    %p53 = scmp.ne.s32.totalorder %s36, %s52
    %p54 = scmp.eq.s32.totalorder %s16, 0
    %p55 = por %p53, %p54
    %s57 = sadd.s32 %s56, 1
    %p60 = scmp.eq.s32.totalorder %s10, 1
    %p61 = scmp.ne.s32.totalorder %s56, %s58
    %p62 = scmp.eq.s32.totalorder %s10, 0
    %p63 = por %p61, %p62
    %p64 = scmp.ne.s32.totalorder %s56, %s58
    %p65 = scmp.eq.s32.totalorder %s15, 1
    %p66 = por %p64, %p65
    %p67 = scmp.ne.s32.totalorder %s58, %s59
    %p68 = scmp.eq.s32.totalorder %s15, 0
    %p69 = por %p67, %p68
    %p70 = scmp.ne.s32.totalorder %s58, %s59
    %p71 = scmp.eq.s32.totalorder %s16, 1
    %p72 = por %p70, %p71
    %p74 = scmp.ne.s32.totalorder %s59, %s73
    %p75 = scmp.eq.s32.totalorder %s16, 0
    %p76 = por %p74, %p75
    %s78 = sadd.s32 %s77, 1
    %p81 = scmp.eq.s32.totalorder %s10, 1
    %p82 = scmp.ne.s32.totalorder %s77, %s79
    %p83 = scmp.eq.s32.totalorder %s10, 0
    %p84 = por %p82, %p83
    %p85 = scmp.ne.s32.totalorder %s77, %s79
    %p86 = scmp.eq.s32.totalorder %s15, 1
    %p87 = por %p85, %p86
    %p88 = scmp.ne.s32.totalorder %s79, %s80
    %p89 = scmp.eq.s32.totalorder %s15, 0
    %p90 = por %p88, %p89
    %p91 = scmp.ne.s32.totalorder %s79, %s80
    %p92 = scmp.eq.s32.totalorder %s16, 1
    %p93 = por %p91, %p92
    %p95 = scmp.ne.s32.totalorder %s80, %s94
    %p96 = scmp.eq.s32.totalorder %s16, 0
    %p97 = por %p95, %p96
    %s99 = sadd.s32 %s98, 1
    %p102 = scmp.eq.s32.totalorder %s10, 1
    %p103 = scmp.ne.s32.totalorder %s98, %s100
    %p104 = scmp.eq.s32.totalorder %s10, 0
    %p105 = por %p103, %p104
    %p106 = scmp.ne.s32.totalorder %s98, %s100
    %p107 = scmp.eq.s32.totalorder %s15, 1
    %p108 = por %p106, %p107
    %p109 = scmp.ne.s32.totalorder %s100, %s101
    %p110 = scmp.eq.s32.totalorder %s15, 0
    %p111 = por %p109, %p110
    %p112 = scmp.ne.s32.totalorder %s100, %s101
    %p113 = scmp.eq.s32.totalorder %s16, 1
    %p114 = por %p112, %p113
    %p116 = scmp.ne.s32.totalorder %s101, %s115
    %p117 = scmp.eq.s32.totalorder %s16, 0
    %p118 = por %p116, %p117
    %s119 = ssub.s32 %s17, %s29
    %s120 = ssub.s32 %s18, %s25
    %s121 = sor.u32 %s119, %s120
    %p122 = scmp.eq.s32.totalorder %s121, 0
    %s124 = sadd.s32 %s123, 1
    %s125 = scalar_select %p122, %s123, %s124
    %p128 = pneg %p122
    %p129 = scmp.eq.s32.totalorder %s10, 1
    %p130 = por %p128, %p129
    %p131 = scmp.ne.s32.totalorder %s123, %s126
    %p132 = scmp.eq.s32.totalorder %s10, 0
    %p133 = por %p131, %p132
    %p134 = scmp.ne.s32.totalorder %s123, %s126
    %p135 = scmp.eq.s32.totalorder %s15, 1
    %p136 = por %p134, %p135
    %p137 = scmp.ne.s32.totalorder %s126, %s127
    %p138 = scmp.eq.s32.totalorder %s15, 0
    %p139 = por %p137, %p138
    %p140 = scmp.ne.s32.totalorder %s126, %s127
    %p141 = scmp.eq.s32.totalorder %s16, 1
    %p142 = por %p140, %p141
    %p144 = scmp.ne.s32.totalorder %s127, %s143
    %p145 = scmp.eq.s32.totalorder %s16, 0
    %p146 = por %p144, %p145
    %p147 = scmp.le.s32.totalorder 1, %s10
    %p148 = scmp.lt.s32.totalorder %s10, 3
    %p149 = pnand %p147, %p148
    %p150 = pneg %p149
    // Predicated region
    $region9: #{temporal_conv_forward.3} parent=5 // pred_check
      _
    $region10: #{temporal_conv_forward.3} parent=5 // pred_check_branch
      %152 = sbr.rel (%p149) target = $region12
    $region11: #{temporal_conv_forward.3} parent=5 // pred_region
      %s153 = ssub.s32 %s10, 1
      // Predicated region
      $region13: #{temporal_conv_forward.3} parent=11 // pred_check
        %p154 = pneg %p69
      $region14: #{temporal_conv_forward.3} parent=11 // pred_check_branch
        %156 = sbr.rel (%p154) target = $region16
      $region15: #{temporal_conv_forward.3} parent=11 // pred_region
        _
      $region16: #{temporal_conv_forward.3} parent=11 // pred_fallthru
        _
      // Predicated region
      $region17: #{temporal_conv_forward.3} parent=11 // pred_check
        %p157 = pneg %p90
      $region18: #{temporal_conv_forward.3} parent=11 // pred_check_branch
        %159 = sbr.rel (%p157) target = $region20
      $region19: #{temporal_conv_forward.3} parent=11 // pred_region
        _
      $region20: #{temporal_conv_forward.3} parent=11 // pred_fallthru
        _
      // Predicated region
      $region21: #{temporal_conv_forward.3} parent=11 // pred_check
        %p160 = pneg %p111
      $region22: #{temporal_conv_forward.3} parent=11 // pred_check_branch
        %162 = sbr.rel (%p160) target = $region24
      $region23: #{temporal_conv_forward.3} parent=11 // pred_region
        _
      $region24: #{temporal_conv_forward.3} parent=11 // pred_fallthru
        _
    $region12: #{temporal_conv_forward.3} parent=5 // pred_fallthru
      _
    %p163 = scmp.lt.s32.totalorder %s10, 2
    // Predicated region
    $region25: #{temporal_conv_forward.3} parent=5 // pred_check
      %p164 = pneg %p163
    $region26: #{temporal_conv_forward.3} parent=5 // pred_check_branch
      %166 = sbr.rel (%p164) target = $region28
    $region27: #{temporal_conv_forward.3} parent=5 // pred_region
      // Predicated region
      $region29: #{temporal_conv_forward.3} parent=27 // pred_check
        %p167 = pneg %p42
      $region30: #{temporal_conv_forward.3} parent=27 // pred_check_branch
        %169 = sbr.rel (%p167) target = $region32
      $region31: #{temporal_conv_forward.3} parent=27 // pred_region
        %p170 = scmp.lt.s32.totalorder %s17, 1
        %s171 = scalar_select %p170, %s17, 1
        %s172 = smul.addr %s171, 18
        %s173 = smul.addr %s172, 4
        %s174 = scalar_lea.vmem %s0, %s173
      $region32: #{temporal_conv_forward.3} parent=27 // pred_fallthru
        _
    $region28: #{temporal_conv_forward.3} parent=5 // pred_fallthru
      _
    %p175 = scmp.le.s32.totalorder 1, %s10
    %p176 = scmp.lt.s32.totalorder %s10, 3
    %p177 = pnand %p175, %p176
    %p178 = pneg %p177
    // Predicated region
    $region33: #{temporal_conv_forward.3} parent=5 // pred_check
      _
    $region34: #{temporal_conv_forward.3} parent=5 // pred_check_branch
      %180 = sbr.rel (%p177) target = $region36
    $region35: #{temporal_conv_forward.3} parent=5 // pred_region
      %s181 = ssub.s32 %s10, 1
      %p182 = scmp.lt.s32.totalorder %s19, 1
      %s183 = scalar_select %p182, %s19, 1
      %s184 = smul.addr %s183, 18
      %s185 = smul.addr %s184, 4
      %s186 = scalar_lea.vmem %s0, %s185
      %p187 = pneg %p48
      %p188 = pneg %p45
      %p189 = pneg %p69
      %p190 = pneg %p66
      %p191 = pneg %p90
      %p192 = pneg %p87
      %p193 = pneg %p111
      %p194 = pneg %p108
      %p195 = pneg %p139
      %p196 = pneg %p136
      %s197 = smul.u32 16, %s20
      %p198 = scmp.lt.s32.totalorder %s19, 1
      %s199 = scalar_select %p198, %s19, 1
      %p200 = scmp.lt.s32.totalorder %s197, 15
      %s201 = scalar_select %p200, %s197, 15
      %s202 = smul.addr %s199, 16
      %s203 = sadd.s32 %s201, %s202
      %s204 = smul.addr %s203, 8
      %s205 = scalar_lea.vmem %s4, %s204
      %p206 = scmp.lt.s32.totalorder %s19, 1
      %s207 = scalar_select %p206, %s19, 1
      %s208 = smul.addr %s207, 18
      %s209 = smul.addr %s208, 4
      %s210 = scalar_lea.vmem %s0, %s209
      %s211 = smul.u32 16, %s20
      %p212 = scmp.lt.s32.totalorder %s19, 1
      %s213 = scalar_select %p212, %s19, 1
      %p214 = scmp.lt.s32.totalorder %s211, 15
      %s215 = scalar_select %p214, %s211, 15
      %s216 = smul.addr %s213, 16
      %s217 = sadd.s32 %s215, %s216
      %s218 = smul.addr %s217, 8
      %s219 = scalar_lea.vmem %s4, %s218
      %s220 = smul.u32 16, %s20
      %s222 = smul.u32 %s20, 128
      %s223 = sshra.s32 %s222, 3
      %s224 = sand.u32 %s222, 7
      %s225 = smul.addr %s223, 4
      %s226 = scalar_lea.vmem %s210, %s225
      %v227 = vld [vmem:[%s226] sm:$0xf]
      %v228 = vld [vmem:[%s226 + $0x4] sm:$0xf]
      %v229 = vld [vmem:[%s226 + $0x8] sm:$0xf]
      %v230 = vld [vmem:[%s226 + $0xc] sm:$0xf]
      %v231 = vld [vmem:[%s226 + $0x10] sm:$0xf]
      %v232 = vld [vmem:[%s226 + $0x14] sm:$0xf]
      %v233 = vld [vmem:[%s226 + $0x18] sm:$0xf]
      %v234 = vld [vmem:[%s226 + $0x1c] sm:$0xf]
      %v235 = vld [vmem:[%s226 + $0x20] sm:$0xf]
      %v236 = vld [vmem:[%s226 + $0x24] sm:$0xf]
      %v237 = vld [vmem:[%s226 + $0x28] sm:$0xf]
      %v238 = vld [vmem:[%s226 + $0x2c] sm:$0xf]
      %v239 = vld [vmem:[%s226 + $0x30] sm:$0xf]
      %v240 = vld [vmem:[%s226 + $0x34] sm:$0xf]
      %v241 = vld [vmem:[%s226 + $0x38] sm:$0xf]
      %v242 = vld [vmem:[%s226 + $0x3c] sm:$0xf]
      %s243 = sadd.s32 %s222, 8
      %s244 = sshra.s32 %s243, 3
      %s245 = sand.u32 %s243, 7
      %s246 = smul.addr %s244, 4
      %s247 = scalar_lea.vmem %s210, %s246
      %v248 = vld [vmem:[%s247] sm:$0xf]
      %v249 = vld [vmem:[%s247 + $0x4] sm:$0xf]
      %v250 = vld [vmem:[%s247 + $0x8] sm:$0xf]
      %v251 = vld [vmem:[%s247 + $0xc] sm:$0xf]
      %v252 = vld [vmem:[%s247 + $0x10] sm:$0xf]
      %v253 = vld [vmem:[%s247 + $0x14] sm:$0xf]
      %v254 = vld [vmem:[%s247 + $0x18] sm:$0xf]
      %v255 = vld [vmem:[%s247 + $0x1c] sm:$0xf]
      %v256 = vld [vmem:[%s247 + $0x20] sm:$0xf]
      %v257 = vld [vmem:[%s247 + $0x24] sm:$0xf]
      %v258 = vld [vmem:[%s247 + $0x28] sm:$0xf]
      %v259 = vld [vmem:[%s247 + $0x2c] sm:$0xf]
      %v260 = vld [vmem:[%s247 + $0x30] sm:$0xf]
      %v261 = vld [vmem:[%s247 + $0x34] sm:$0xf]
      %v262 = vld [vmem:[%s247 + $0x38] sm:$0xf]
      %v263 = vld [vmem:[%s247 + $0x3c] sm:$0xf]
      %s264 = sadd.s32 %s222, 16
      %s265 = sshra.s32 %s264, 3
      %s266 = sand.u32 %s264, 7
      %s267 = smul.addr %s265, 4
      %s268 = scalar_lea.vmem %s210, %s267
      %v269 = vld [vmem:[%s268] sm:$0xf]
      %v270 = vld [vmem:[%s268 + $0x4] sm:$0xf]
      %v271 = vld [vmem:[%s268 + $0x8] sm:$0xf]
      %v272 = vld [vmem:[%s268 + $0xc] sm:$0xf]
      %v273 = vld [vmem:[%s268 + $0x10] sm:$0xf]
      %v274 = vld [vmem:[%s268 + $0x14] sm:$0xf]
      %v275 = vld [vmem:[%s268 + $0x18] sm:$0xf]
      %v276 = vld [vmem:[%s268 + $0x1c] sm:$0xf]
      %v277 = vld [vmem:[%s268 + $0x20] sm:$0xf]
      %v278 = vld [vmem:[%s268 + $0x24] sm:$0xf]
      %v279 = vld [vmem:[%s268 + $0x28] sm:$0xf]
      %v280 = vld [vmem:[%s268 + $0x2c] sm:$0xf]
      %v281 = vld [vmem:[%s268 + $0x30] sm:$0xf]
      %v282 = vld [vmem:[%s268 + $0x34] sm:$0xf]
      %v283 = vld [vmem:[%s268 + $0x38] sm:$0xf]
      %v284 = vld [vmem:[%s268 + $0x3c] sm:$0xf]
      %v301 = vunpack.c.l.b16 %v227
      %v302 = vunpack.c.l.b16 %v228
      %v303 = vunpack.c.l.b16 %v229
      %v304 = vunpack.c.l.b16 %v230
      %v305 = vunpack.c.l.b16 %v231
      %v306 = vunpack.c.l.b16 %v232
      %v307 = vunpack.c.l.b16 %v233
      %v308 = vunpack.c.l.b16 %v234
      %v309 = vunpack.c.l.b16 %v235
      %v310 = vunpack.c.l.b16 %v236
      %v311 = vunpack.c.l.b16 %v237
      %v312 = vunpack.c.l.b16 %v238
      %v313 = vunpack.c.l.b16 %v239
      %v314 = vunpack.c.l.b16 %v240
      %v315 = vunpack.c.l.b16 %v241
      %v316 = vunpack.c.l.b16 %v242
      %v317 = vpack.c.b16 %v302, %v301
      %v318 = vpack.c.b16 %v304, %v303
      %v319 = vpack.c.b16 %v306, %v305
      %v320 = vpack.c.b16 %v308, %v307
      %v321 = vpack.c.b16 %v310, %v309
      %v322 = vpack.c.b16 %v312, %v311
      %v323 = vpack.c.b16 %v314, %v313
      %v324 = vpack.c.b16 %v316, %v315
      %v341 = vunpack.c.l.b16 %v248
      %v342 = vunpack.c.l.b16 %v249
      %v343 = vunpack.c.l.b16 %v250
      %v344 = vunpack.c.l.b16 %v251
      %v345 = vunpack.c.l.b16 %v252
      %v346 = vunpack.c.l.b16 %v253
      %v347 = vunpack.c.l.b16 %v254
      %v348 = vunpack.c.l.b16 %v255
      %v349 = vunpack.c.l.b16 %v256
      %v350 = vunpack.c.l.b16 %v257
      %v351 = vunpack.c.l.b16 %v258
      %v352 = vunpack.c.l.b16 %v259
      %v353 = vunpack.c.l.b16 %v260
      %v354 = vunpack.c.l.b16 %v261
      %v355 = vunpack.c.l.b16 %v262
      %v356 = vunpack.c.l.b16 %v263
      %v357 = vpack.c.b16 %v342, %v341
      %v358 = vpack.c.b16 %v344, %v343
      %v359 = vpack.c.b16 %v346, %v345
      %v360 = vpack.c.b16 %v348, %v347
      %v361 = vpack.c.b16 %v350, %v349
      %v362 = vpack.c.b16 %v352, %v351
      %v363 = vpack.c.b16 %v354, %v353
      %v364 = vpack.c.b16 %v356, %v355
      %365 = vrot.lane.b32.xlu0 %v357, 4
      %v366 = vpop.permute.xlu0 %365
      %367 = vrot.lane.b32.xlu0 %v358, 4
      %v368 = vpop.permute.xlu0 %367
      %369 = vrot.lane.b32.xlu0 %v359, 4
      %v370 = vpop.permute.xlu0 %369
      %371 = vrot.lane.b32.xlu0 %v360, 4
      %v372 = vpop.permute.xlu0 %371
      %373 = vrot.lane.b32.xlu0 %v361, 4
      %v374 = vpop.permute.xlu0 %373
      %375 = vrot.lane.b32.xlu0 %v362, 4
      %v376 = vpop.permute.xlu0 %375
      %377 = vrot.lane.b32.xlu0 %v363, 4
      %v378 = vpop.permute.xlu0 %377
      %379 = vrot.lane.b32.xlu0 %v364, 4
      %v380 = vpop.permute.xlu0 %379
      %v397 = vunpack.c.l.b16 %v269
      %v398 = vunpack.c.l.b16 %v270
      %v399 = vunpack.c.l.b16 %v271
      %v400 = vunpack.c.l.b16 %v272
      %v401 = vunpack.c.l.b16 %v273
      %v402 = vunpack.c.l.b16 %v274
      %v403 = vunpack.c.l.b16 %v275
      %v404 = vunpack.c.l.b16 %v276
      %v405 = vunpack.c.l.b16 %v277
      %v406 = vunpack.c.l.b16 %v278
      %v407 = vunpack.c.l.b16 %v279
      %v408 = vunpack.c.l.b16 %v280
      %v409 = vunpack.c.l.b16 %v281
      %v410 = vunpack.c.l.b16 %v282
      %v411 = vunpack.c.l.b16 %v283
      %v412 = vunpack.c.l.b16 %v284
      %v413 = vpack.c.b16 %v398, %v397
      %v414 = vpack.c.b16 %v400, %v399
      %v415 = vpack.c.b16 %v402, %v401
      %v416 = vpack.c.b16 %v404, %v403
      %v417 = vpack.c.b16 %v406, %v405
      %v418 = vpack.c.b16 %v408, %v407
      %v419 = vpack.c.b16 %v410, %v409
      %v420 = vpack.c.b16 %v412, %v411
      %421 = vrot.lane.b32.xlu0 %v413, 8
      %v422 = vpop.permute.xlu0 %421
      %423 = vrot.lane.b32.xlu0 %v414, 8
      %v424 = vpop.permute.xlu0 %423
      %425 = vrot.lane.b32.xlu0 %v415, 8
      %v426 = vpop.permute.xlu0 %425
      %427 = vrot.lane.b32.xlu0 %v416, 8
      %v428 = vpop.permute.xlu0 %427
      %429 = vrot.lane.b32.xlu0 %v417, 8
      %v430 = vpop.permute.xlu0 %429
      %431 = vrot.lane.b32.xlu0 %v418, 8
      %v432 = vpop.permute.xlu0 %431
      %433 = vrot.lane.b32.xlu0 %v419, 8
      %v434 = vpop.permute.xlu0 %433
      %435 = vrot.lane.b32.xlu0 %v420, 8
      %v436 = vpop.permute.xlu0 %435
      %vm437 = vcmask 31744
      %v440 = vsel %vm437, %v317, %v366
      %v443 = vsel %vm437, %v318, %v368
      %v446 = vsel %vm437, %v319, %v370
      %v449 = vsel %vm437, %v320, %v372
      %v452 = vsel %vm437, %v321, %v374
      %v455 = vsel %vm437, %v322, %v376
      %v458 = vsel %vm437, %v323, %v378
      %v461 = vsel %vm437, %v324, %v380
      %vm462 = vcmask 64512
      %v464 = vsel %vm462, %v440, %v422
      %v466 = vsel %vm462, %v443, %v424
      %v468 = vsel %vm462, %v446, %v426
      %v470 = vsel %vm462, %v449, %v428
      %v472 = vsel %vm462, %v452, %v430
      %v474 = vsel %vm462, %v455, %v432
      %v476 = vsel %vm462, %v458, %v434
      %v478 = vsel %vm462, %v461, %v436
      %v479 = vld [vmem:[%s1] sm:$0xf]
      %v480 = vld [vmem:[%s1 + $0x4] sm:$0x3]
      %v483 = vunpack.c.l.b16 %v479
      %v484 = vunpack.c.l.b16 %v480
      %v485 = vpack.c.b16 %v484, %v483
      %vm486 = vcmask 97280
      %v487 = vsel %vm486, %v464, 0
      %v489 = vsel %vm486, %v466, 0
      %v491 = vsel %vm486, %v468, 0
      %v493 = vsel %vm486, %v470, 0
      %v495 = vsel %vm486, %v472, 0
      %v497 = vsel %vm486, %v474, 0
      %v499 = vsel %vm486, %v476, 0
      %v501 = vsel %vm486, %v478, 0
      %vm503 = vcmask 1045504
      %v505 = vsel %vm503, %v485, 0
      %507 = vmatprep.subr.bf16.mxu0 0
      %508 = vmatpush1.bf16.msra.mxu0 %v505
      %509 = vmatprep.subr.bf16.mxu0 0
      %510 = vmatpush1.bf16.msra.mxu0 0
      %511 = vmatprep.subr.bf16.mxu0 0
      %512 = vmatpush1.bf16.msra.mxu0 0
      %513 = vmatprep.subr.bf16.mxu0 0
      %514 = vmatpush1.bf16.msra.mxu0 0
      %515 = vmatprep.subr.bf16.mxu0 0
      %516 = vmatpush1.bf16.msra.mxu0 0
      %517 = vmatprep.subr.bf16.mxu0 0
      %518 = vmatpush1.bf16.msra.mxu0 0
      %519 = vmatprep.subr.bf16.mxu0 0
      %520 = vmatpush1.bf16.msra.mxu0 0
      %521 = vmatprep.subr.bf16.mxu0 0
      %522 = vmatpush1.bf16.msra.mxu0 0
      %523 = vmatprep.subr.bf16.mxu0 0
      %524 = vmatpush1.bf16.msra.mxu0 0
      %525 = vmatprep.subr.bf16.mxu0 0
      %526 = vmatpush1.bf16.msra.mxu0 0
      %527 = vmatprep.subr.bf16.mxu0 0
      %528 = vmatpush1.bf16.msra.mxu0 0
      %529 = vmatprep.subr.bf16.mxu0 0
      %530 = vmatpush1.bf16.msra.mxu0 0
      %531 = vmatprep.subr.bf16.mxu0 0
      %532 = vmatpush1.bf16.msra.mxu0 0
      %533 = vmatprep.subr.bf16.mxu0 0
      %534 = vmatpush1.bf16.msra.mxu0 0
      %535 = vmatprep.subr.bf16.mxu0 0
      %536 = vmatpush1.bf16.msra.mxu0 0
      %537 = vmatprep.subr.bf16.mxu0 0
      %538 = vmatpush1.bf16.msra.mxu0 0
      %539 = vmatprep.mubr.bf16.mxu0 0
      %540 = vmatmul.mubr.bf16.gmra.mrb[0].mxu0 %v487
      %v541 = vpop.f32.mrb[0].mxu0
      %v542 = vadd.f32 0.0, %v541
      %v543 = vpop.f32.mrb[0].mxu0
      %v544 = vpop.f32.mrb[0].mxu0
      %v545 = vadd.f32 0.0, %v544
      %v546 = vpop.f32.mrb[0].mxu0
      %547 = vmatprep.mubr.bf16.mxu0 0
      %548 = vmatmul.mubr.bf16.gmra.mrb[0].mxu0 %v489
      %v549 = vpop.f32.mrb[0].mxu0
      %v550 = vadd.f32 0.0, %v549
      %v551 = vpop.f32.mrb[0].mxu0
      %v552 = vpop.f32.mrb[0].mxu0
      %v553 = vadd.f32 0.0, %v552
      %v554 = vpop.f32.mrb[0].mxu0
      %555 = vmatprep.mubr.bf16.mxu0 0
      %556 = vmatmul.mubr.bf16.gmra.mrb[0].mxu0 %v491
      %v557 = vpop.f32.mrb[0].mxu0
      %v558 = vadd.f32 0.0, %v557
      %v559 = vpop.f32.mrb[0].mxu0
      %v560 = vpop.f32.mrb[0].mxu0
      %v561 = vadd.f32 0.0, %v560
      %v562 = vpop.f32.mrb[0].mxu0
      %563 = vmatprep.mubr.bf16.mxu0 0
      %564 = vmatmul.mubr.bf16.gmra.mrb[0].mxu0 %v493
      %v565 = vpop.f32.mrb[0].mxu0
      %v566 = vadd.f32 0.0, %v565
      %v567 = vpop.f32.mrb[0].mxu0
      %v568 = vpop.f32.mrb[0].mxu0
      %v569 = vadd.f32 0.0, %v568
      %v570 = vpop.f32.mrb[0].mxu0
      %571 = vmatprep.mubr.bf16.mxu0 0
      %572 = vmatmul.mubr.bf16.gmra.mrb[0].mxu0 %v495
      %v573 = vpop.f32.mrb[0].mxu0
      %v574 = vadd.f32 0.0, %v573
      %v575 = vpop.f32.mrb[0].mxu0
      %v576 = vpop.f32.mrb[0].mxu0
      %v577 = vadd.f32 0.0, %v576
      %v578 = vpop.f32.mrb[0].mxu0
      %579 = vmatprep.mubr.bf16.mxu0 0
      %580 = vmatmul.mubr.bf16.gmra.mrb[0].mxu0 %v497
      %v581 = vpop.f32.mrb[0].mxu0
      %v582 = vadd.f32 0.0, %v581
      %v583 = vpop.f32.mrb[0].mxu0
      %v584 = vpop.f32.mrb[0].mxu0
      %v585 = vadd.f32 0.0, %v584
      %v586 = vpop.f32.mrb[0].mxu0
      %587 = vmatprep.mubr.bf16.mxu0 0
      %588 = vmatmul.mubr.bf16.gmra.mrb[0].mxu0 %v499
      %v589 = vpop.f32.mrb[0].mxu0
      %v590 = vadd.f32 0.0, %v589
      %v591 = vpop.f32.mrb[0].mxu0
      %v592 = vpop.f32.mrb[0].mxu0
      %v593 = vadd.f32 0.0, %v592
      %v594 = vpop.f32.mrb[0].mxu0
      %595 = vmatprep.mubr.bf16.mxu0 0
      %596 = vmatmul.mubr.bf16.gmra.mrb[0].mxu0 %v501
      %v597 = vpop.f32.mrb[0].mxu0
      %v598 = vadd.f32 0.0, %v597
      %v599 = vpop.f32.mrb[0].mxu0
      %v600 = vpop.f32.mrb[0].mxu0
      %v601 = vadd.f32 0.0, %v600
      %v602 = vpop.f32.mrb[0].mxu0
      %603 = vdwg.mxu0
      %v604 = vld [vmem:[%s2] sm:$0x1]
      %v606 = vlaneseq
      %v607 = vshrl.u32 %v606, 7
      %v608 = vsub.s32 0, %v607
      %v609 = vrot.slane %v604, %v608
      %v611 = vmul.f32 %v542, %v609
      %v612 = vmul.f32 %v545, %v609
      %v613 = vmul.f32 %v550, %v609
      %v614 = vmul.f32 %v553, %v609
      %v615 = vmul.f32 %v558, %v609
      %v616 = vmul.f32 %v561, %v609
      %v617 = vmul.f32 %v566, %v609
      %v618 = vmul.f32 %v569, %v609
      %v619 = vmul.f32 %v574, %v609
      %v620 = vmul.f32 %v577, %v609
      %v621 = vmul.f32 %v582, %v609
      %v622 = vmul.f32 %v585, %v609
      %v623 = vmul.f32 %v590, %v609
      %v624 = vmul.f32 %v593, %v609
      %v625 = vmul.f32 %v598, %v609
      %v626 = vmul.f32 %v601, %v609
      %v627 = vld [vmem:[%s3] sm:$0x1]
      %v629 = vlaneseq
      %v630 = vshrl.u32 %v629, 7
      %v631 = vsub.s32 0, %v630
      %v632 = vrot.slane %v627, %v631
      %v634 = vadd.f32 %v611, %v632
      %v635 = vadd.f32 %v612, %v632
      %v636 = vadd.f32 %v613, %v632
      %v637 = vadd.f32 %v614, %v632
      %v638 = vadd.f32 %v615, %v632
      %v639 = vadd.f32 %v616, %v632
      %v640 = vadd.f32 %v617, %v632
      %v641 = vadd.f32 %v618, %v632
      %v642 = vadd.f32 %v619, %v632
      %v643 = vadd.f32 %v620, %v632
      %v644 = vadd.f32 %v621, %v632
      %v645 = vadd.f32 %v622, %v632
      %v646 = vadd.f32 %v623, %v632
      %v647 = vadd.f32 %v624, %v632
      %v648 = vadd.f32 %v625, %v632
      %v649 = vadd.f32 %v626, %v632
      %650 = vst.msk [vmem:[%s219] sm:$0xff] %vm462, %v634
      %651 = vst.msk [vmem:[%s219 + $0x8] sm:$0xff] %vm462, %v635
      %652 = vst.msk [vmem:[%s219 + $0x10] sm:$0xff] %vm462, %v636
      %653 = vst.msk [vmem:[%s219 + $0x18] sm:$0xff] %vm462, %v637
      %654 = vst.msk [vmem:[%s219 + $0x20] sm:$0xff] %vm462, %v638
      %655 = vst.msk [vmem:[%s219 + $0x28] sm:$0xff] %vm462, %v639
      %656 = vst.msk [vmem:[%s219 + $0x30] sm:$0xff] %vm462, %v640
      %657 = vst.msk [vmem:[%s219 + $0x38] sm:$0xff] %vm462, %v641
      %658 = vst.msk [vmem:[%s219 + $0x40] sm:$0xff] %vm462, %v642
      %659 = vst.msk [vmem:[%s219 + $0x48] sm:$0xff] %vm462, %v643
      %660 = vst.msk [vmem:[%s219 + $0x50] sm:$0xff] %vm462, %v644
      %661 = vst.msk [vmem:[%s219 + $0x58] sm:$0xff] %vm462, %v645
      %662 = vst.msk [vmem:[%s219 + $0x60] sm:$0xff] %vm462, %v646
      %663 = vst.msk [vmem:[%s219 + $0x68] sm:$0xff] %vm462, %v647
      %664 = vst.msk [vmem:[%s219 + $0x70] sm:$0xff] %vm462, %v648
      %665 = vst.msk [vmem:[%s219 + $0x78] sm:$0xff] %vm462, %v649
      %s666 = smul.u32 16, %s20
      %p667 = scmp.lt.s32.totalorder %s19, 1
      %s668 = scalar_select %p667, %s19, 1
      %p669 = scmp.lt.s32.totalorder %s666, 15
      %s670 = scalar_select %p669, %s666, 15
      %s671 = smul.addr %s668, 16
      %s672 = sadd.s32 %s670, %s671
      %s673 = smul.addr %s672, 8
      %s674 = scalar_lea.vmem %s4, %s673
      // Predicated region
      $region37: #{temporal_conv_forward.3} parent=35 // pred_check
        %p675 = pneg %p136
      $region38: #{temporal_conv_forward.3} parent=35 // pred_check_branch
        %677 = sbr.rel (%p675) target = $region40
      $region39: #{temporal_conv_forward.3} parent=35 // pred_region
        %s678 = smul.u32 16, %s20
      $region40: #{temporal_conv_forward.3} parent=35 // pred_fallthru
        _
    $region36: #{temporal_conv_forward.3} parent=5 // pred_fallthru
      _
    %p679 = scmp.le.s32.totalorder 2, %s10
    // Predicated region
    $region41: #{temporal_conv_forward.3} parent=5 // pred_check
      %p680 = pneg %p679
    $region42: #{temporal_conv_forward.3} parent=5 // pred_check_branch
      %682 = sbr.rel (%p680) target = $region44
    $region43: #{temporal_conv_forward.3} parent=5 // pred_region
      %s683 = ssub.s32 %s10, 2
      // Predicated region
      $region45: #{temporal_conv_forward.3} parent=43 // pred_check
        %p684 = pneg %p142
      $region46: #{temporal_conv_forward.3} parent=43 // pred_check_branch
        %686 = sbr.rel (%p684) target = $region48
      $region47: #{temporal_conv_forward.3} parent=43 // pred_region
        %s687 = smul.u32 16, %s22
        %p688 = scmp.lt.s32.totalorder %s21, 1
        %s689 = scalar_select %p688, %s21, 1
        %p690 = scmp.lt.s32.totalorder %s687, 15
        %s691 = scalar_select %p690, %s687, 15
        %s692 = smul.addr %s689, 16
        %s693 = sadd.s32 %s691, %s692
        %s694 = smul.addr %s693, 8
        %s695 = scalar_lea.vmem %s4, %s694
      $region48: #{temporal_conv_forward.3} parent=43 // pred_fallthru
        _
    $region44: #{temporal_conv_forward.3} parent=5 // pred_fallthru
      _
  $region6: #{temporal_conv_forward.3} parent=0 // loop_footer
    %s14 = sadd.s32 1, %s10
  $region7: #{temporal_conv_forward.3} parent=0 // loop_footer_branch
    %9 = sbr.rel target = $region3
  $region8: #{temporal_conv_forward.3} parent=0 // loop_exit
    _

// kernel: temporal_conv_forward.2
$region0: #{temporal_conv_forward.2}
  #allocation0 [shape = 'u32[]', space=smem, size = 0x4, offset = 0x4, fixed_abs, tag = 'smem constant byte address 0x4 - core index']
  #allocation1 [shape = 'u32[144,128]{1,0:T(1,128)}', space=vmem, size = 0x12000, scoped, tag = 'internal scratch']
  %s0 = inlined_call_operand.vmem [shape: bf16[2,144,4], index: 0, kind: input, shape index: {}]
  %s1 = inlined_call_operand.vmem [shape: bf16[12,8], index: 1, kind: input, shape index: {}]
  %s2 = inlined_call_operand.vmem [shape: f32[128,1], index: 2, kind: input, shape index: {}]
  %s3 = inlined_call_operand.vmem [shape: f32[2,1,2,8], index: 3, kind: output, shape index: {}]
  %s4 = sld [smem:[#allocation0]]
  $region45: #{temporal_conv_forward.2} parent=0
    _
  %s6 = ssub.s32 1, %s4
  %s7 = scalar_select 0, %s6, %s4
  loop: start=0, step=1, limit=4
  $region2: #{temporal_conv_forward.2} parent=0 // loop_pre_header
    _
  $region3: #{temporal_conv_forward.2} parent=0 // loop_header
    %s9 = sphi 0, %s13
    %p10 = scmp.ge.s32.totalorder %s9, 4
    %s16 = sphi 0, %s28
    %s17 = sphi 0, %s24
    %s18 = sphi 0, %s16
    %s19 = sphi 0, %s17
    %s20 = sphi 0, %s18
    %s21 = sphi 0, %s19
    %s31 = sphi 0, %s33
    %s34 = sphi 0, %s31
    %s35 = sphi 0, %s34
    %s51 = sphi 0, %s35
    %s55 = sphi 0, %s55
    %s57 = sphi 0, %s55
    %s58 = sphi 0, %s57
    %s72 = sphi 0, %s58
    %s78 = sphi 0, %s80
    %s81 = sphi 0, %s78
    %s82 = sphi 0, %s81
    %s98 = sphi 0, %s82
    %s106 = sphi 0, %s108
    %s109 = sphi 0, %s106
    %s110 = sphi 0, %s109
    %s126 = sphi 0, %s110
  $region4: #{temporal_conv_forward.2} parent=0 // loop_header_branch
    %12 = sbr.rel (%p10) target = $region8
  $region5: #{temporal_conv_forward.2} parent=0 // loop_body
    %s14 = ssub.s32 %s9, 1
    %s15 = ssub.s32 %s9, 2
    %s22 = sadd.s32 1, %s17
    %p23 = scmp.ge.s32.totalorder %s22, 1
    %s24 = scalar_select %p23, 0, %s22
    %s25 = sadd.s32 1, %s16
    %s26 = scalar_select %p23, %s25, %s16
    %p27 = scmp.ge.s32.totalorder %s26, 2
    %s28 = scalar_select %p27, 0, %s26
    %s29 = ssub.s32 %s16, %s28
    %p30 = scmp.eq.s32.totalorder %s29, 0
    %s32 = sadd.s32 %s31, 1
    %s33 = scalar_select %p30, %s31, %s32
    %p36 = pneg %p30
    %p37 = scmp.eq.s32.totalorder %s9, 1
    %p38 = por %p36, %p37
    %p39 = scmp.ne.s32.totalorder %s31, %s34
    %p40 = scmp.eq.s32.totalorder %s9, 0
    %p41 = por %p39, %p40
    %p42 = scmp.ne.s32.totalorder %s31, %s34
    %p43 = scmp.eq.s32.totalorder %s14, 1
    %p44 = por %p42, %p43
    %p45 = scmp.ne.s32.totalorder %s34, %s35
    %p46 = scmp.eq.s32.totalorder %s14, 0
    %p47 = por %p45, %p46
    %p48 = scmp.ne.s32.totalorder %s34, %s35
    %p49 = scmp.eq.s32.totalorder %s15, 1
    %p50 = por %p48, %p49
    %p52 = scmp.ne.s32.totalorder %s35, %s51
    %p53 = scmp.eq.s32.totalorder %s15, 0
    %p54 = por %p52, %p53
    %s56 = sadd.s32 %s55, 1
    %p59 = scmp.eq.s32.totalorder %s9, 1
    %p60 = scmp.ne.s32.totalorder %s55, %s57
    %p61 = scmp.eq.s32.totalorder %s9, 0
    %p62 = por %p60, %p61
    %p63 = scmp.ne.s32.totalorder %s55, %s57
    %p64 = scmp.eq.s32.totalorder %s14, 1
    %p65 = por %p63, %p64
    %p66 = scmp.ne.s32.totalorder %s57, %s58
    %p67 = scmp.eq.s32.totalorder %s14, 0
    %p68 = por %p66, %p67
    %p69 = scmp.ne.s32.totalorder %s57, %s58
    %p70 = scmp.eq.s32.totalorder %s15, 1
    %p71 = por %p69, %p70
    %p73 = scmp.ne.s32.totalorder %s58, %s72
    %p74 = scmp.eq.s32.totalorder %s15, 0
    %p75 = por %p73, %p74
    %s76 = ssub.s32 %s17, %s24
    %p77 = scmp.eq.s32.totalorder %s76, 0
    %s79 = sadd.s32 %s78, 1
    %s80 = scalar_select %p77, %s78, %s79
    %p83 = pneg %p77
    %p84 = scmp.eq.s32.totalorder %s9, 1
    %p85 = por %p83, %p84
    %p86 = scmp.ne.s32.totalorder %s78, %s81
    %p87 = scmp.eq.s32.totalorder %s9, 0
    %p88 = por %p86, %p87
    %p89 = scmp.ne.s32.totalorder %s78, %s81
    %p90 = scmp.eq.s32.totalorder %s14, 1
    %p91 = por %p89, %p90
    %p92 = scmp.ne.s32.totalorder %s81, %s82
    %p93 = scmp.eq.s32.totalorder %s14, 0
    %p94 = por %p92, %p93
    %p95 = scmp.ne.s32.totalorder %s81, %s82
    %p96 = scmp.eq.s32.totalorder %s15, 1
    %p97 = por %p95, %p96
    %p99 = scmp.ne.s32.totalorder %s82, %s98
    %p100 = scmp.eq.s32.totalorder %s15, 0
    %p101 = por %p99, %p100
    %s102 = ssub.s32 %s16, %s28
    %s103 = ssub.s32 %s17, %s24
    %s104 = sor.u32 %s102, %s103
    %p105 = scmp.eq.s32.totalorder %s104, 0
    %s107 = sadd.s32 %s106, 1
    %s108 = scalar_select %p105, %s106, %s107
    %p111 = pneg %p105
    %p112 = scmp.eq.s32.totalorder %s9, 1
    %p113 = por %p111, %p112
    %p114 = scmp.ne.s32.totalorder %s106, %s109
    %p115 = scmp.eq.s32.totalorder %s9, 0
    %p116 = por %p114, %p115
    %p117 = scmp.ne.s32.totalorder %s106, %s109
    %p118 = scmp.eq.s32.totalorder %s14, 1
    %p119 = por %p117, %p118
    %p120 = scmp.ne.s32.totalorder %s109, %s110
    %p121 = scmp.eq.s32.totalorder %s14, 0
    %p122 = por %p120, %p121
    %p123 = scmp.ne.s32.totalorder %s109, %s110
    %p124 = scmp.eq.s32.totalorder %s15, 1
    %p125 = por %p123, %p124
    %p127 = scmp.ne.s32.totalorder %s110, %s126
    %p128 = scmp.eq.s32.totalorder %s15, 0
    %p129 = por %p127, %p128
    %p130 = scmp.le.s32.totalorder 1, %s9
    %p131 = scmp.lt.s32.totalorder %s9, 3
    %p132 = pnand %p130, %p131
    %p133 = pneg %p132
    // Predicated region
    $region9: #{temporal_conv_forward.2} parent=5 // pred_check
      _
    $region10: #{temporal_conv_forward.2} parent=5 // pred_check_branch
      %135 = sbr.rel (%p132) target = $region12
    $region11: #{temporal_conv_forward.2} parent=5 // pred_region
      %s136 = ssub.s32 %s9, 1
      // Predicated region
      $region13: #{temporal_conv_forward.2} parent=11 // pred_check
        %p137 = pneg %p68
      $region14: #{temporal_conv_forward.2} parent=11 // pred_check_branch
        %139 = sbr.rel (%p137) target = $region16
      $region15: #{temporal_conv_forward.2} parent=11 // pred_region
        _
      $region16: #{temporal_conv_forward.2} parent=11 // pred_fallthru
        _
      // Predicated region
      $region17: #{temporal_conv_forward.2} parent=11 // pred_check
        %p140 = pneg %p94
      $region18: #{temporal_conv_forward.2} parent=11 // pred_check_branch
        %142 = sbr.rel (%p140) target = $region20
      $region19: #{temporal_conv_forward.2} parent=11 // pred_region
        %s143 = smul.u32 16, %s19
        %p144 = scmp.lt.s32.totalorder %s143, 15
        %s145 = scalar_select %p144, %s143, 15
        %s146 = smul.addr %s145, 8
        %s147 = scalar_lea.vmem %s2, %s146
        %s148 = smul.u32 16, %s19
      $region20: #{temporal_conv_forward.2} parent=11 // pred_fallthru
        _
    $region12: #{temporal_conv_forward.2} parent=5 // pred_fallthru
      _
    %p149 = scmp.lt.s32.totalorder %s9, 2
    // Predicated region
    $region21: #{temporal_conv_forward.2} parent=5 // pred_check
      %p150 = pneg %p149
    $region22: #{temporal_conv_forward.2} parent=5 // pred_check_branch
      %152 = sbr.rel (%p150) target = $region24
    $region23: #{temporal_conv_forward.2} parent=5 // pred_region
      // Predicated region
      $region25: #{temporal_conv_forward.2} parent=23 // pred_check
        %p153 = pneg %p41
      $region26: #{temporal_conv_forward.2} parent=23 // pred_check_branch
        %155 = sbr.rel (%p153) target = $region28
      $region27: #{temporal_conv_forward.2} parent=23 // pred_region
        %p156 = scmp.lt.s32.totalorder %s16, 1
        %s157 = scalar_select %p156, %s16, 1
        %s158 = smul.addr %s157, 18
        %s159 = smul.addr %s158, 4
        %s160 = scalar_lea.vmem %s0, %s159
      $region28: #{temporal_conv_forward.2} parent=23 // pred_fallthru
        _
    $region24: #{temporal_conv_forward.2} parent=5 // pred_fallthru
      _
    %p161 = scmp.le.s32.totalorder 1, %s9
    %p162 = scmp.lt.s32.totalorder %s9, 3
    %p163 = pnand %p161, %p162
    %p164 = pneg %p163
    // Predicated region
    $region29: #{temporal_conv_forward.2} parent=5 // pred_check
      _
    $region30: #{temporal_conv_forward.2} parent=5 // pred_check_branch
      %166 = sbr.rel (%p163) target = $region32
    $region31: #{temporal_conv_forward.2} parent=5 // pred_region
      %s167 = ssub.s32 %s9, 1
      %p168 = scmp.lt.s32.totalorder %s18, 1
      %s169 = scalar_select %p168, %s18, 1
      %s170 = smul.addr %s169, 18
      %s171 = smul.addr %s170, 4
      %s172 = scalar_lea.vmem %s0, %s171
      %p173 = pneg %p47
      %p174 = pneg %p44
      %p175 = pneg %p68
      %p176 = pneg %p65
      %s177 = smul.u32 16, %s19
      %p178 = scmp.lt.s32.totalorder %s177, 15
      %s179 = scalar_select %p178, %s177, 15
      %s180 = smul.addr %s179, 8
      %s181 = scalar_lea.vmem %s2, %s180
      %p182 = pneg %p94
      %p183 = pneg %p91
      %p184 = pneg %p122
      %p185 = pneg %p119
      %p186 = scmp.lt.s32.totalorder %s18, 1
      %s187 = scalar_select %p186, %s18, 1
      %p188 = scmp.lt.s32.totalorder %s19, 0
      %s189 = scalar_select %p188, %s19, 0
      %s190 = sadd.s32 %s189, %s187
      %s191 = smul.addr %s190, 2
      %s192 = scalar_lea.vmem %s3, %s191
      %p193 = scmp.lt.s32.totalorder %s18, 1
      %s194 = scalar_select %p193, %s18, 1
      %s195 = smul.addr %s194, 18
      %s196 = smul.addr %s195, 4
      %s197 = scalar_lea.vmem %s0, %s196
      %s198 = smul.u32 16, %s19
      %p199 = scmp.lt.s32.totalorder %s198, 15
      %s200 = scalar_select %p199, %s198, 15
      %s201 = smul.addr %s200, 8
      %s202 = scalar_lea.vmem %s2, %s201
      %s203 = smul.u32 16, %s19
      %p204 = scmp.lt.s32.totalorder %s18, 1
      %s205 = scalar_select %p204, %s18, 1
      %p206 = scmp.lt.s32.totalorder %s19, 0
      %s207 = scalar_select %p206, %s19, 0
      %s208 = sadd.s32 %s207, %s205
      %s209 = smul.addr %s208, 2
      %s210 = scalar_lea.vmem %s3, %s209
      %s212 = smul.u32 %s19, 128
      %s213 = sshra.s32 %s212, 3
      %s214 = sand.u32 %s212, 7
      %s215 = smul.addr %s213, 4
      %s216 = scalar_lea.vmem %s197, %s215
      %v217 = vld [vmem:[%s216] sm:$0xf]
      %v218 = vld [vmem:[%s216 + $0x4] sm:$0xf]
      %v219 = vld [vmem:[%s216 + $0x8] sm:$0xf]
      %v220 = vld [vmem:[%s216 + $0xc] sm:$0xf]
      %v221 = vld [vmem:[%s216 + $0x10] sm:$0xf]
      %v222 = vld [vmem:[%s216 + $0x14] sm:$0xf]
      %v223 = vld [vmem:[%s216 + $0x18] sm:$0xf]
      %v224 = vld [vmem:[%s216 + $0x1c] sm:$0xf]
      %v225 = vld [vmem:[%s216 + $0x20] sm:$0xf]
      %v226 = vld [vmem:[%s216 + $0x24] sm:$0xf]
      %v227 = vld [vmem:[%s216 + $0x28] sm:$0xf]
      %v228 = vld [vmem:[%s216 + $0x2c] sm:$0xf]
      %v229 = vld [vmem:[%s216 + $0x30] sm:$0xf]
      %v230 = vld [vmem:[%s216 + $0x34] sm:$0xf]
      %v231 = vld [vmem:[%s216 + $0x38] sm:$0xf]
      %v232 = vld [vmem:[%s216 + $0x3c] sm:$0xf]
      %s233 = sadd.s32 %s212, 8
      %s234 = sshra.s32 %s233, 3
      %s235 = sand.u32 %s233, 7
      %s236 = smul.addr %s234, 4
      %s237 = scalar_lea.vmem %s197, %s236
      %v238 = vld [vmem:[%s237] sm:$0xf]
      %v239 = vld [vmem:[%s237 + $0x4] sm:$0xf]
      %v240 = vld [vmem:[%s237 + $0x8] sm:$0xf]
      %v241 = vld [vmem:[%s237 + $0xc] sm:$0xf]
      %v242 = vld [vmem:[%s237 + $0x10] sm:$0xf]
      %v243 = vld [vmem:[%s237 + $0x14] sm:$0xf]
      %v244 = vld [vmem:[%s237 + $0x18] sm:$0xf]
      %v245 = vld [vmem:[%s237 + $0x1c] sm:$0xf]
      %v246 = vld [vmem:[%s237 + $0x20] sm:$0xf]
      %v247 = vld [vmem:[%s237 + $0x24] sm:$0xf]
      %v248 = vld [vmem:[%s237 + $0x28] sm:$0xf]
      %v249 = vld [vmem:[%s237 + $0x2c] sm:$0xf]
      %v250 = vld [vmem:[%s237 + $0x30] sm:$0xf]
      %v251 = vld [vmem:[%s237 + $0x34] sm:$0xf]
      %v252 = vld [vmem:[%s237 + $0x38] sm:$0xf]
      %v253 = vld [vmem:[%s237 + $0x3c] sm:$0xf]
      %s254 = sadd.s32 %s212, 16
      %s255 = sshra.s32 %s254, 3
      %s256 = sand.u32 %s254, 7
      %s257 = smul.addr %s255, 4
      %s258 = scalar_lea.vmem %s197, %s257
      %v259 = vld [vmem:[%s258] sm:$0xf]
      %v260 = vld [vmem:[%s258 + $0x4] sm:$0xf]
      %v261 = vld [vmem:[%s258 + $0x8] sm:$0xf]
      %v262 = vld [vmem:[%s258 + $0xc] sm:$0xf]
      %v263 = vld [vmem:[%s258 + $0x10] sm:$0xf]
      %v264 = vld [vmem:[%s258 + $0x14] sm:$0xf]
      %v265 = vld [vmem:[%s258 + $0x18] sm:$0xf]
      %v266 = vld [vmem:[%s258 + $0x1c] sm:$0xf]
      %v267 = vld [vmem:[%s258 + $0x20] sm:$0xf]
      %v268 = vld [vmem:[%s258 + $0x24] sm:$0xf]
      %v269 = vld [vmem:[%s258 + $0x28] sm:$0xf]
      %v270 = vld [vmem:[%s258 + $0x2c] sm:$0xf]
      %v271 = vld [vmem:[%s258 + $0x30] sm:$0xf]
      %v272 = vld [vmem:[%s258 + $0x34] sm:$0xf]
      %v273 = vld [vmem:[%s258 + $0x38] sm:$0xf]
      %v274 = vld [vmem:[%s258 + $0x3c] sm:$0xf]
      %v291 = vunpack.c.l.b16 %v217
      %v292 = vunpack.c.l.b16 %v218
      %v293 = vunpack.c.l.b16 %v219
      %v294 = vunpack.c.l.b16 %v220
      %v295 = vunpack.c.l.b16 %v221
      %v296 = vunpack.c.l.b16 %v222
      %v297 = vunpack.c.l.b16 %v223
      %v298 = vunpack.c.l.b16 %v224
      %v299 = vunpack.c.l.b16 %v225
      %v300 = vunpack.c.l.b16 %v226
      %v301 = vunpack.c.l.b16 %v227
      %v302 = vunpack.c.l.b16 %v228
      %v303 = vunpack.c.l.b16 %v229
      %v304 = vunpack.c.l.b16 %v230
      %v305 = vunpack.c.l.b16 %v231
      %v306 = vunpack.c.l.b16 %v232
      %v307 = vpack.c.b16 %v292, %v291
      %v308 = vpack.c.b16 %v294, %v293
      %v309 = vpack.c.b16 %v296, %v295
      %v310 = vpack.c.b16 %v298, %v297
      %v311 = vpack.c.b16 %v300, %v299
      %v312 = vpack.c.b16 %v302, %v301
      %v313 = vpack.c.b16 %v304, %v303
      %v314 = vpack.c.b16 %v306, %v305
      %v331 = vunpack.c.l.b16 %v238
      %v332 = vunpack.c.l.b16 %v239
      %v333 = vunpack.c.l.b16 %v240
      %v334 = vunpack.c.l.b16 %v241
      %v335 = vunpack.c.l.b16 %v242
      %v336 = vunpack.c.l.b16 %v243
      %v337 = vunpack.c.l.b16 %v244
      %v338 = vunpack.c.l.b16 %v245
      %v339 = vunpack.c.l.b16 %v246
      %v340 = vunpack.c.l.b16 %v247
      %v341 = vunpack.c.l.b16 %v248
      %v342 = vunpack.c.l.b16 %v249
      %v343 = vunpack.c.l.b16 %v250
      %v344 = vunpack.c.l.b16 %v251
      %v345 = vunpack.c.l.b16 %v252
      %v346 = vunpack.c.l.b16 %v253
      %v347 = vpack.c.b16 %v332, %v331
      %v348 = vpack.c.b16 %v334, %v333
      %v349 = vpack.c.b16 %v336, %v335
      %v350 = vpack.c.b16 %v338, %v337
      %v351 = vpack.c.b16 %v340, %v339
      %v352 = vpack.c.b16 %v342, %v341
      %v353 = vpack.c.b16 %v344, %v343
      %v354 = vpack.c.b16 %v346, %v345
      %355 = vrot.lane.b32.xlu0 %v347, 4
      %v356 = vpop.permute.xlu0 %355
      %357 = vrot.lane.b32.xlu0 %v348, 4
      %v358 = vpop.permute.xlu0 %357
      %359 = vrot.lane.b32.xlu0 %v349, 4
      %v360 = vpop.permute.xlu0 %359
      %361 = vrot.lane.b32.xlu0 %v350, 4
      %v362 = vpop.permute.xlu0 %361
      %363 = vrot.lane.b32.xlu0 %v351, 4
      %v364 = vpop.permute.xlu0 %363
      %365 = vrot.lane.b32.xlu0 %v352, 4
      %v366 = vpop.permute.xlu0 %365
      %367 = vrot.lane.b32.xlu0 %v353, 4
      %v368 = vpop.permute.xlu0 %367
      %369 = vrot.lane.b32.xlu0 %v354, 4
      %v370 = vpop.permute.xlu0 %369
      %v387 = vunpack.c.l.b16 %v259
      %v388 = vunpack.c.l.b16 %v260
      %v389 = vunpack.c.l.b16 %v261
      %v390 = vunpack.c.l.b16 %v262
      %v391 = vunpack.c.l.b16 %v263
      %v392 = vunpack.c.l.b16 %v264
      %v393 = vunpack.c.l.b16 %v265
      %v394 = vunpack.c.l.b16 %v266
      %v395 = vunpack.c.l.b16 %v267
      %v396 = vunpack.c.l.b16 %v268
      %v397 = vunpack.c.l.b16 %v269
      %v398 = vunpack.c.l.b16 %v270
      %v399 = vunpack.c.l.b16 %v271
      %v400 = vunpack.c.l.b16 %v272
      %v401 = vunpack.c.l.b16 %v273
      %v402 = vunpack.c.l.b16 %v274
      %v403 = vpack.c.b16 %v388, %v387
      %v404 = vpack.c.b16 %v390, %v389
      %v405 = vpack.c.b16 %v392, %v391
      %v406 = vpack.c.b16 %v394, %v393
      %v407 = vpack.c.b16 %v396, %v395
      %v408 = vpack.c.b16 %v398, %v397
      %v409 = vpack.c.b16 %v400, %v399
      %v410 = vpack.c.b16 %v402, %v401
      %411 = vrot.lane.b32.xlu0 %v403, 8
      %v412 = vpop.permute.xlu0 %411
      %413 = vrot.lane.b32.xlu0 %v404, 8
      %v414 = vpop.permute.xlu0 %413
      %415 = vrot.lane.b32.xlu0 %v405, 8
      %v416 = vpop.permute.xlu0 %415
      %417 = vrot.lane.b32.xlu0 %v406, 8
      %v418 = vpop.permute.xlu0 %417
      %419 = vrot.lane.b32.xlu0 %v407, 8
      %v420 = vpop.permute.xlu0 %419
      %421 = vrot.lane.b32.xlu0 %v408, 8
      %v422 = vpop.permute.xlu0 %421
      %423 = vrot.lane.b32.xlu0 %v409, 8
      %v424 = vpop.permute.xlu0 %423
      %425 = vrot.lane.b32.xlu0 %v410, 8
      %v426 = vpop.permute.xlu0 %425
      %vm427 = vcmask 31744
      %v430 = vsel %vm427, %v307, %v356
      %v433 = vsel %vm427, %v308, %v358
      %v436 = vsel %vm427, %v309, %v360
      %v439 = vsel %vm427, %v310, %v362
      %v442 = vsel %vm427, %v311, %v364
      %v445 = vsel %vm427, %v312, %v366
      %v448 = vsel %vm427, %v313, %v368
      %v451 = vsel %vm427, %v314, %v370
      %vm452 = vcmask 64512
      %v454 = vsel %vm452, %v430, %v412
      %v456 = vsel %vm452, %v433, %v414
      %v458 = vsel %vm452, %v436, %v416
      %v460 = vsel %vm452, %v439, %v418
      %v462 = vsel %vm452, %v442, %v420
      %v464 = vsel %vm452, %v445, %v422
      %v466 = vsel %vm452, %v448, %v424
      %v468 = vsel %vm452, %v451, %v426
      %v469 = vld [vmem:[%s1] sm:$0xf]
      %v470 = vld [vmem:[%s1 + $0x4] sm:$0x3]
      %v473 = vunpack.c.l.b16 %v469
      %v474 = vunpack.c.l.b16 %v470
      %v475 = vpack.c.b16 %v474, %v473
      %vm476 = vcmask 97280
      %v477 = vsel %vm476, %v454, 0
      %v479 = vsel %vm476, %v456, 0
      %v481 = vsel %vm476, %v458, 0
      %v483 = vsel %vm476, %v460, 0
      %v485 = vsel %vm476, %v462, 0
      %v487 = vsel %vm476, %v464, 0
      %v489 = vsel %vm476, %v466, 0
      %v491 = vsel %vm476, %v468, 0
      %vm493 = vcmask 1045504
      %v495 = vsel %vm493, %v475, 0
      %497 = vmatprep.subr.bf16.mxu0 0
      %498 = vmatpush1.bf16.msra.mxu0 %v495
      %499 = vmatprep.subr.bf16.mxu0 0
      %500 = vmatpush1.bf16.msra.mxu0 0
      %501 = vmatprep.subr.bf16.mxu0 0
      %502 = vmatpush1.bf16.msra.mxu0 0
      %503 = vmatprep.subr.bf16.mxu0 0
      %504 = vmatpush1.bf16.msra.mxu0 0
      %505 = vmatprep.subr.bf16.mxu0 0
      %506 = vmatpush1.bf16.msra.mxu0 0
      %507 = vmatprep.subr.bf16.mxu0 0
      %508 = vmatpush1.bf16.msra.mxu0 0
      %509 = vmatprep.subr.bf16.mxu0 0
      %510 = vmatpush1.bf16.msra.mxu0 0
      %511 = vmatprep.subr.bf16.mxu0 0
      %512 = vmatpush1.bf16.msra.mxu0 0
      %513 = vmatprep.subr.bf16.mxu0 0
      %514 = vmatpush1.bf16.msra.mxu0 0
      %515 = vmatprep.subr.bf16.mxu0 0
      %516 = vmatpush1.bf16.msra.mxu0 0
      %517 = vmatprep.subr.bf16.mxu0 0
      %518 = vmatpush1.bf16.msra.mxu0 0
      %519 = vmatprep.subr.bf16.mxu0 0
      %520 = vmatpush1.bf16.msra.mxu0 0
      %521 = vmatprep.subr.bf16.mxu0 0
      %522 = vmatpush1.bf16.msra.mxu0 0
      %523 = vmatprep.subr.bf16.mxu0 0
      %524 = vmatpush1.bf16.msra.mxu0 0
      %525 = vmatprep.subr.bf16.mxu0 0
      %526 = vmatpush1.bf16.msra.mxu0 0
      %527 = vmatprep.subr.bf16.mxu0 0
      %528 = vmatpush1.bf16.msra.mxu0 0
      %529 = vmatprep.mubr.bf16.mxu0 0
      %530 = vmatmul.mubr.bf16.gmra.mrb[0].mxu0 %v477
      %v531 = vpop.f32.mrb[0].mxu0
      %v532 = vadd.f32 0.0, %v531
      %v533 = vpop.f32.mrb[0].mxu0
      %v534 = vpop.f32.mrb[0].mxu0
      %v535 = vadd.f32 0.0, %v534
      %v536 = vpop.f32.mrb[0].mxu0
      %537 = vmatprep.mubr.bf16.mxu0 0
      %538 = vmatmul.mubr.bf16.gmra.mrb[0].mxu0 %v479
      %v539 = vpop.f32.mrb[0].mxu0
      %v540 = vadd.f32 0.0, %v539
      %v541 = vpop.f32.mrb[0].mxu0
      %v542 = vpop.f32.mrb[0].mxu0
      %v543 = vadd.f32 0.0, %v542
      %v544 = vpop.f32.mrb[0].mxu0
      %545 = vmatprep.mubr.bf16.mxu0 0
      %546 = vmatmul.mubr.bf16.gmra.mrb[0].mxu0 %v481
      %v547 = vpop.f32.mrb[0].mxu0
      %v548 = vadd.f32 0.0, %v547
      %v549 = vpop.f32.mrb[0].mxu0
      %v550 = vpop.f32.mrb[0].mxu0
      %v551 = vadd.f32 0.0, %v550
      %v552 = vpop.f32.mrb[0].mxu0
      %553 = vmatprep.mubr.bf16.mxu0 0
      %554 = vmatmul.mubr.bf16.gmra.mrb[0].mxu0 %v483
      %v555 = vpop.f32.mrb[0].mxu0
      %v556 = vadd.f32 0.0, %v555
      %v557 = vpop.f32.mrb[0].mxu0
      %v558 = vpop.f32.mrb[0].mxu0
      %v559 = vadd.f32 0.0, %v558
      %v560 = vpop.f32.mrb[0].mxu0
      %561 = vmatprep.mubr.bf16.mxu0 0
      %562 = vmatmul.mubr.bf16.gmra.mrb[0].mxu0 %v485
      %v563 = vpop.f32.mrb[0].mxu0
      %v564 = vadd.f32 0.0, %v563
      %v565 = vpop.f32.mrb[0].mxu0
      %v566 = vpop.f32.mrb[0].mxu0
      %v567 = vadd.f32 0.0, %v566
      %v568 = vpop.f32.mrb[0].mxu0
      %569 = vmatprep.mubr.bf16.mxu0 0
      %570 = vmatmul.mubr.bf16.gmra.mrb[0].mxu0 %v487
      %v571 = vpop.f32.mrb[0].mxu0
      %v572 = vadd.f32 0.0, %v571
      %v573 = vpop.f32.mrb[0].mxu0
      %v574 = vpop.f32.mrb[0].mxu0
      %v575 = vadd.f32 0.0, %v574
      %v576 = vpop.f32.mrb[0].mxu0
      %577 = vmatprep.mubr.bf16.mxu0 0
      %578 = vmatmul.mubr.bf16.gmra.mrb[0].mxu0 %v489
      %v579 = vpop.f32.mrb[0].mxu0
      %v580 = vadd.f32 0.0, %v579
      %v581 = vpop.f32.mrb[0].mxu0
      %v582 = vpop.f32.mrb[0].mxu0
      %v583 = vadd.f32 0.0, %v582
      %v584 = vpop.f32.mrb[0].mxu0
      %585 = vmatprep.mubr.bf16.mxu0 0
      %586 = vmatmul.mubr.bf16.gmra.mrb[0].mxu0 %v491
      %v587 = vpop.f32.mrb[0].mxu0
      %v588 = vadd.f32 0.0, %v587
      %v589 = vpop.f32.mrb[0].mxu0
      %v590 = vpop.f32.mrb[0].mxu0
      %v591 = vadd.f32 0.0, %v590
      %v592 = vpop.f32.mrb[0].mxu0
      %593 = vdwg.mxu0
      %v594 = vld [vmem:[%s202] sm:$0xff]
      %v595 = vld [vmem:[%s202 + $0x8] sm:$0xff]
      %v596 = vld [vmem:[%s202 + $0x10] sm:$0xff]
      %v597 = vld [vmem:[%s202 + $0x18] sm:$0xff]
      %v598 = vld [vmem:[%s202 + $0x20] sm:$0xff]
      %v599 = vld [vmem:[%s202 + $0x28] sm:$0xff]
      %v600 = vld [vmem:[%s202 + $0x30] sm:$0xff]
      %v601 = vld [vmem:[%s202 + $0x38] sm:$0xff]
      %v602 = vld [vmem:[%s202 + $0x40] sm:$0xff]
      %v603 = vld [vmem:[%s202 + $0x48] sm:$0xff]
      %v604 = vld [vmem:[%s202 + $0x50] sm:$0xff]
      %v605 = vld [vmem:[%s202 + $0x58] sm:$0xff]
      %v606 = vld [vmem:[%s202 + $0x60] sm:$0xff]
      %v607 = vld [vmem:[%s202 + $0x68] sm:$0xff]
      %v608 = vld [vmem:[%s202 + $0x70] sm:$0xff]
      %v609 = vld [vmem:[%s202 + $0x78] sm:$0xff]
      %vm610 = vcmask 7168
      %v611 = vsel %vm610, %v594, 0.0
      %v612 = vsel %vm610, %v595, 0.0
      %v613 = vadd.f32 %v611, %v612
      %v614 = vsel %vm610, %v596, 0.0
      %v615 = vadd.f32 %v613, %v614
      %v616 = vsel %vm610, %v597, 0.0
      %v617 = vadd.f32 %v615, %v616
      %v618 = vsel %vm610, %v598, 0.0
      %v619 = vadd.f32 %v617, %v618
      %v620 = vsel %vm610, %v599, 0.0
      %v621 = vadd.f32 %v619, %v620
      %v622 = vsel %vm610, %v600, 0.0
      %v623 = vadd.f32 %v621, %v622
      %v624 = vsel %vm610, %v601, 0.0
      %v625 = vadd.f32 %v623, %v624
      %v626 = vsel %vm610, %v602, 0.0
      %v627 = vadd.f32 %v625, %v626
      %v628 = vsel %vm610, %v603, 0.0
      %v629 = vadd.f32 %v627, %v628
      %v630 = vsel %vm610, %v604, 0.0
      %v631 = vadd.f32 %v629, %v630
      %v632 = vsel %vm610, %v605, 0.0
      %v633 = vadd.f32 %v631, %v632
      %v634 = vsel %vm610, %v606, 0.0
      %v635 = vadd.f32 %v633, %v634
      %v636 = vsel %vm610, %v607, 0.0
      %v637 = vadd.f32 %v635, %v636
      %v638 = vsel %vm610, %v608, 0.0
      %v639 = vadd.f32 %v637, %v638
      %v640 = vsel %vm610, %v609, 0.0
      %v641 = vadd.f32 %v639, %v640
      %v642 = vrot.slane %v641, 4
      %v643 = vadd.f32 %v641, %v642
      %v644 = vrot.slane %v643, 2
      %v645 = vadd.f32 %v643, %v644
      %v646 = vrot.slane %v645, 1
      %v647 = vadd.f32 %v645, %v646
      %649 = vset.pattern.permute.xlu0 0
      %650 = vperm.xlu0 %649, %v594
      %v651 = vpop.permute.xlu0 %650
      %654 = vset.pattern.permute.xlu0 0
      %655 = vperm.xlu0 %654, %v595
      %v656 = vpop.permute.xlu0 %655
      %659 = vset.pattern.permute.xlu0 0
      %660 = vperm.xlu0 %659, %v596
      %v661 = vpop.permute.xlu0 %660
      %664 = vset.pattern.permute.xlu0 0
      %665 = vperm.xlu0 %664, %v597
      %v666 = vpop.permute.xlu0 %665
      %669 = vset.pattern.permute.xlu0 0
      %670 = vperm.xlu0 %669, %v598
      %v671 = vpop.permute.xlu0 %670
      %674 = vset.pattern.permute.xlu0 0
      %675 = vperm.xlu0 %674, %v599
      %v676 = vpop.permute.xlu0 %675
      %679 = vset.pattern.permute.xlu0 0
      %680 = vperm.xlu0 %679, %v600
      %v681 = vpop.permute.xlu0 %680
      %684 = vset.pattern.permute.xlu0 0
      %685 = vperm.xlu0 %684, %v601
      %v686 = vpop.permute.xlu0 %685
      %689 = vset.pattern.permute.xlu0 0
      %690 = vperm.xlu0 %689, %v602
      %v691 = vpop.permute.xlu0 %690
      %694 = vset.pattern.permute.xlu0 0
      %695 = vperm.xlu0 %694, %v603
      %v696 = vpop.permute.xlu0 %695
      %699 = vset.pattern.permute.xlu0 0
      %700 = vperm.xlu0 %699, %v604
      %v701 = vpop.permute.xlu0 %700
      %704 = vset.pattern.permute.xlu0 0
      %705 = vperm.xlu0 %704, %v605
      %v706 = vpop.permute.xlu0 %705
      %709 = vset.pattern.permute.xlu0 0
      %710 = vperm.xlu0 %709, %v606
      %v711 = vpop.permute.xlu0 %710
      %714 = vset.pattern.permute.xlu0 0
      %715 = vperm.xlu0 %714, %v607
      %v716 = vpop.permute.xlu0 %715
      %719 = vset.pattern.permute.xlu0 0
      %720 = vperm.xlu0 %719, %v608
      %v721 = vpop.permute.xlu0 %720
      %724 = vset.pattern.permute.xlu0 0
      %725 = vperm.xlu0 %724, %v609
      %v726 = vpop.permute.xlu0 %725
      %v728 = vmul.f32 %v532, %v651
      %v729 = vmul.f32 %v535, %v656
      %v730 = vmul.f32 %v540, %v661
      %v731 = vmul.f32 %v543, %v666
      %v732 = vmul.f32 %v548, %v671
      %v733 = vmul.f32 %v551, %v676
      %v734 = vmul.f32 %v556, %v681
      %v735 = vmul.f32 %v559, %v686
      %v736 = vmul.f32 %v564, %v691
      %v737 = vmul.f32 %v567, %v696
      %v738 = vmul.f32 %v572, %v701
      %v739 = vmul.f32 %v575, %v706
      %v740 = vmul.f32 %v580, %v711
      %v741 = vmul.f32 %v583, %v716
      %v742 = vmul.f32 %v588, %v721
      %v743 = vmul.f32 %v591, %v726
      %v744 = vsel %vm452, %v728, 0.0
      %v745 = vsel %vm452, %v729, 0.0
      %v746 = vadd.f32 %v744, %v745
      %v747 = vsel %vm452, %v730, 0.0
      %v748 = vadd.f32 %v746, %v747
      %v749 = vsel %vm452, %v731, 0.0
      %v750 = vadd.f32 %v748, %v749
      %v751 = vsel %vm452, %v732, 0.0
      %v752 = vadd.f32 %v750, %v751
      %v753 = vsel %vm452, %v733, 0.0
      %v754 = vadd.f32 %v752, %v753
      %v755 = vsel %vm452, %v734, 0.0
      %v756 = vadd.f32 %v754, %v755
      %v757 = vsel %vm452, %v735, 0.0
      %v758 = vadd.f32 %v756, %v757
      %v759 = vsel %vm452, %v736, 0.0
      %v760 = vadd.f32 %v758, %v759
      %v761 = vsel %vm452, %v737, 0.0
      %v762 = vadd.f32 %v760, %v761
      %v763 = vsel %vm452, %v738, 0.0
      %v764 = vadd.f32 %v762, %v763
      %v765 = vsel %vm452, %v739, 0.0
      %v766 = vadd.f32 %v764, %v765
      %v767 = vsel %vm452, %v740, 0.0
      %v768 = vadd.f32 %v766, %v767
      %v769 = vsel %vm452, %v741, 0.0
      %v770 = vadd.f32 %v768, %v769
      %v771 = vsel %vm452, %v742, 0.0
      %v772 = vadd.f32 %v770, %v771
      %v773 = vsel %vm452, %v743, 0.0
      %v774 = vadd.f32 %v772, %v773
      %v775 = vrot.slane %v774, 4
      %v776 = vadd.f32 %v774, %v775
      %v777 = vrot.slane %v776, 2
      %v778 = vadd.f32 %v776, %v777
      %v779 = vrot.slane %v778, 1
      %v780 = vadd.f32 %v778, %v779
      %782 = vset.pattern.permute.xlu0 0
      %783 = vperm.xlu0 %782, %v647
      %v784 = vpop.permute.xlu0 %783
      %v786 = vrcp.pop %v784
      %v787 = vmul.f32 %v780, %v786
      %v788 = vsub.f32 %v532, %v787
      %v789 = vsub.f32 %v535, %v787
      %v790 = vsub.f32 %v540, %v787
      %v791 = vsub.f32 %v543, %v787
      %v792 = vsub.f32 %v548, %v787
      %v793 = vsub.f32 %v551, %v787
      %v794 = vsub.f32 %v556, %v787
      %v795 = vsub.f32 %v559, %v787
      %v796 = vsub.f32 %v564, %v787
      %v797 = vsub.f32 %v567, %v787
      %v798 = vsub.f32 %v572, %v787
      %v799 = vsub.f32 %v575, %v787
      %v800 = vsub.f32 %v580, %v787
      %v801 = vsub.f32 %v583, %v787
      %v802 = vsub.f32 %v588, %v787
      %v803 = vsub.f32 %v591, %v787
      %v804 = vmul.f32 %v788, %v651
      %v805 = vmul.f32 %v789, %v656
      %v806 = vmul.f32 %v790, %v661
      %v807 = vmul.f32 %v791, %v666
      %v808 = vmul.f32 %v792, %v671
      %v809 = vmul.f32 %v793, %v676
      %v810 = vmul.f32 %v794, %v681
      %v811 = vmul.f32 %v795, %v686
      %v812 = vmul.f32 %v796, %v691
      %v813 = vmul.f32 %v797, %v696
      %v814 = vmul.f32 %v798, %v701
      %v815 = vmul.f32 %v799, %v706
      %v816 = vmul.f32 %v800, %v711
      %v817 = vmul.f32 %v801, %v716
      %v818 = vmul.f32 %v802, %v721
      %v819 = vmul.f32 %v803, %v726
      %v820 = vmul.f32 %v804, %v804
      %v821 = vmul.f32 %v805, %v805
      %v822 = vmul.f32 %v806, %v806
      %v823 = vmul.f32 %v807, %v807
      %v824 = vmul.f32 %v808, %v808
      %v825 = vmul.f32 %v809, %v809
      %v826 = vmul.f32 %v810, %v810
      %v827 = vmul.f32 %v811, %v811
      %v828 = vmul.f32 %v812, %v812
      %v829 = vmul.f32 %v813, %v813
      %v830 = vmul.f32 %v814, %v814
      %v831 = vmul.f32 %v815, %v815
      %v832 = vmul.f32 %v816, %v816
      %v833 = vmul.f32 %v817, %v817
      %v834 = vmul.f32 %v818, %v818
      %v835 = vmul.f32 %v819, %v819
      %v836 = vsel %vm452, %v820, 0.0
      %v837 = vsel %vm452, %v821, 0.0
      %v838 = vadd.f32 %v836, %v837
      %v839 = vsel %vm452, %v822, 0.0
      %v840 = vadd.f32 %v838, %v839
      %v841 = vsel %vm452, %v823, 0.0
      %v842 = vadd.f32 %v840, %v841
      %v843 = vsel %vm452, %v824, 0.0
      %v844 = vadd.f32 %v842, %v843
      %v845 = vsel %vm452, %v825, 0.0
      %v846 = vadd.f32 %v844, %v845
      %v847 = vsel %vm452, %v826, 0.0
      %v848 = vadd.f32 %v846, %v847
      %v849 = vsel %vm452, %v827, 0.0
      %v850 = vadd.f32 %v848, %v849
      %v851 = vsel %vm452, %v828, 0.0
      %v852 = vadd.f32 %v850, %v851
      %v853 = vsel %vm452, %v829, 0.0
      %v854 = vadd.f32 %v852, %v853
      %v855 = vsel %vm452, %v830, 0.0
      %v856 = vadd.f32 %v854, %v855
      %v857 = vsel %vm452, %v831, 0.0
      %v858 = vadd.f32 %v856, %v857
      %v859 = vsel %vm452, %v832, 0.0
      %v860 = vadd.f32 %v858, %v859
      %v861 = vsel %vm452, %v833, 0.0
      %v862 = vadd.f32 %v860, %v861
      %v863 = vsel %vm452, %v834, 0.0
      %v864 = vadd.f32 %v862, %v863
      %v865 = vsel %vm452, %v835, 0.0
      %v866 = vadd.f32 %v864, %v865
      %v867 = vrot.slane %v866, 4
      %v868 = vadd.f32 %v866, %v867
      %v869 = vrot.slane %v868, 2
      %v870 = vadd.f32 %v868, %v869
      %v871 = vrot.slane %v870, 1
      %v872 = vadd.f32 %v870, %v871
      %vm873 = vcmask 1040384
      %v874 = vsel %vm873, %v780, %v872
      %vm875 = vcmask 58368
      %876 = vst.msk [vmem:[%s210] sm:$0x3] %vm875, %v874
      %p877 = scmp.lt.s32.totalorder %s18, 1
      %s878 = scalar_select %p877, %s18, 1
      %p879 = scmp.lt.s32.totalorder %s19, 0
      %s880 = scalar_select %p879, %s19, 0
      %s881 = sadd.s32 %s880, %s878
      %s882 = smul.addr %s881, 2
      %s883 = scalar_lea.vmem %s3, %s882
      // Predicated region
      $region33: #{temporal_conv_forward.2} parent=31 // pred_check
        %p884 = pneg %p119
      $region34: #{temporal_conv_forward.2} parent=31 // pred_check_branch
        %886 = sbr.rel (%p884) target = $region36
      $region35: #{temporal_conv_forward.2} parent=31 // pred_region
        _
      $region36: #{temporal_conv_forward.2} parent=31 // pred_fallthru
        _
    $region32: #{temporal_conv_forward.2} parent=5 // pred_fallthru
      _
    %p887 = scmp.le.s32.totalorder 2, %s9
    // Predicated region
    $region37: #{temporal_conv_forward.2} parent=5 // pred_check
      %p888 = pneg %p887
    $region38: #{temporal_conv_forward.2} parent=5 // pred_check_branch
      %890 = sbr.rel (%p888) target = $region40
    $region39: #{temporal_conv_forward.2} parent=5 // pred_region
      %s891 = ssub.s32 %s9, 2
      // Predicated region
      $region41: #{temporal_conv_forward.2} parent=39 // pred_check
        %p892 = pneg %p125
      $region42: #{temporal_conv_forward.2} parent=39 // pred_check_branch
        %894 = sbr.rel (%p892) target = $region44
      $region43: #{temporal_conv_forward.2} parent=39 // pred_region
        %p895 = scmp.lt.s32.totalorder %s20, 1
        %s896 = scalar_select %p895, %s20, 1
        %p897 = scmp.lt.s32.totalorder %s21, 0
        %s898 = scalar_select %p897, %s21, 0
        %s899 = sadd.s32 %s898, %s896
        %s900 = smul.addr %s899, 2
        %s901 = scalar_lea.vmem %s3, %s900
      $region44: #{temporal_conv_forward.2} parent=39 // pred_fallthru
        _
    $region40: #{temporal_conv_forward.2} parent=5 // pred_fallthru
      _
  $region6: #{temporal_conv_forward.2} parent=0 // loop_footer
    %s13 = sadd.s32 1, %s9
  $region7: #{temporal_conv_forward.2} parent=0 // loop_footer_branch
    %8 = sbr.rel target = $region3
  $region8: #{temporal_conv_forward.2} parent=0 // loop_exit
    _

</llo_original>
